<compile_context>
chip_gen: v7x
topology: tpu7x:2x2x1
jax: 0.10.0
libtpu: 0.0.40
codegen_flags: <defaults>
</compile_context>

<pallas_src>
import math

import jax
import jax.numpy as jnp
import numpy as np
from jax.experimental import pallas as pl
from jax.experimental.pallas import tpu as pltpu

# ----- module hyper-parameters (mirroring VCOPN.__init__) -------------------
TUPLE_LEN = 3
FEATURE_SIZE = 32                       # "feature_size" (512 in the paper; small here)
FC7_OUT = 512                           # hard-coded in the module: nn.Linear(2*F, 512)
PAIR_NUM = TUPLE_LEN * (TUPLE_LEN - 1) // 2
CLASS_NUM = math.factorial(TUPLE_LEN)
CLASS_PAD = 128                         # lane-dense padded class dim
PAIRS = [(i, j) for i in range(TUPLE_LEN) for j in range(i + 1, TUPLE_LEN)]


# ----- fused Pallas kernel ----------------------------------------------------
def vcopn_kernel(x_ref, wbt_ref, bb_ref, w7_ref, b7_ref, w8_ref, b8_ref, o_ref):
    # x_ref:  [L, tile_b, C*THW] bf16   (clip-major, within a clip c-major/thw-minor)
    # wbt_ref:[C*THW, F] bf16           wb tiled over THW and pre-scaled by 1/THW
    # bb_ref: [1, F] f32
    # w7_ref: [2F, 512] bf16;  b7_ref: [1, 512] f32
    # w8_ref: [512*PAIR, CLASS_PAD] bf16;  b8_ref: [1, CLASS_PAD] f32
    # o_ref:  [tile_b, CLASS_PAD] f32
    L = TUPLE_LEN
    F = FEATURE_SIZE
    tb = o_ref.shape[0]

    wbt = wbt_ref[...]
    bb = bb_ref[...]
    w7a = w7_ref[0:F, :]            # fc7 weight split at K=F (pair = concat(f_i, f_j))
    w7b = w7_ref[F:2 * F, :]
    b7 = b7_ref[...]

    # ---- base network (mean-pool folded into the matmul) + fc7 K-split --------
    if tb % 16 == 0:
        # One stacked dot over all L clips: [L, tb, CT] -> [L*tb, CT] is a free
        # leading-dim collapse for bf16 when tb is a multiple of 16.
        ct = x_ref.shape[2]
        xs = x_ref[...].reshape(L * tb, ct)
        fa = jnp.maximum(
            jnp.dot(xs, wbt, preferred_element_type=jnp.float32) + bb, 0.0)
        fab = fa.astype(jnp.bfloat16)                                   # [L*tb, F]
        a_all = jnp.dot(fab, w7a, preferred_element_type=jnp.float32)   # [L*tb, 512]
        b_all = jnp.dot(fab, w7b, preferred_element_type=jnp.float32)
        a_l = [a_all[l * tb:(l + 1) * tb] for l in range(L)]
        b_l = [b_all[l * tb:(l + 1) * tb] for l in range(L)]
    else:
        # Tiny / unaligned batch tile: per-clip dots (compile-time fallback).
        a_l, b_l = [], []
        for l in range(L):
            fl = jnp.maximum(
                jnp.dot(x_ref[l], wbt, preferred_element_type=jnp.float32) + bb, 0.0)
            flb = fl.astype(jnp.bfloat16)
            a_l.append(jnp.dot(flb, w7a, preferred_element_type=jnp.float32))
            b_l.append(jnp.dot(flb, w7b, preferred_element_type=jnp.float32))

    # ---- pairwise fc7 (ReLU) + fc8, accumulated in vregs (no VMEM round-trips) -
    # TODO(synk): nn.Dropout(p=0.5) is identity here (inference mode).
    acc = jnp.zeros((tb, CLASS_PAD), jnp.float32)
    for p, (i, j) in enumerate(PAIRS):
        h = jnp.maximum(a_l[i] + b_l[j] + b7, 0.0)                      # [tb, 512]
        acc = acc + jnp.dot(h.astype(jnp.bfloat16),
                            w8_ref[p * FC7_OUT:(p + 1) * FC7_OUT, :],
                            preferred_element_type=jnp.float32)
    o_ref[...] = acc + b8_ref[...]


# ----- batch-tile selection ----------------------------------------------------
def _pick_tile_b(B, cap=256, min_split=64):
    """Largest batch tile that (a) divides B, (b) is a multiple of 16 (aligned
    sublane/packed-bf16 blocks + free in-kernel collapse) or equals B,
    (c) is <= cap (keeps VMEM ~10 MiB, safe on v5e/v6e/v7x), and when possible
    (d) leaves >= 2 grid steps so v7x's 2 TensorCores both get work."""
    valid = [d for d in range(1, B + 1)
             if B % d == 0 and (d % 16 == 0 or d == B)]
    multi = [d for d in valid if d <= cap and d >= min_split and B // d >= 2]
    if multi:
        return max(multi)
    small = [d for d in valid if d <= cap]
    return max(small) if small else B


# ----- wrapper ----------------------------------------------------------------
def vcopn_forward(tup, params):
    B, L, C, T, H, W = tup.shape
    assert L == TUPLE_LEN
    THW = T * H * W
    CT = C * THW

    # x: [L, B, C*THW] in bf16 — the dominant HBM stream, halved vs f32.
    x = jnp.transpose(tup.reshape(B, L, CT), (1, 0, 2)).astype(jnp.bfloat16)

    # Fold the 1/THW mean scale into the base weight, row-tiled to match the
    # [C, THW] flattening of each clip (row index = c*THW + t).
    wbt = (jnp.repeat(params["wb"], THW, axis=0) * (1.0 / THW)).astype(jnp.bfloat16)
    w7 = params["w7"].astype(jnp.bfloat16)

    # Pad fc8 weight / bias so the output class dim is lane-dense (128).
    w8p = jnp.zeros((FC7_OUT * PAIR_NUM, CLASS_PAD), jnp.bfloat16)
    w8p = w8p.at[:, :CLASS_NUM].set(params["w8"].astype(jnp.bfloat16))
    b8p = jnp.zeros((1, CLASS_PAD), jnp.float32).at[:, :CLASS_NUM].set(params["b8"])

    bb = params["bb"].astype(jnp.float32)
    b7 = params["b7"].astype(jnp.float32)

    tile_b = _pick_tile_b(B)
    assert B % tile_b == 0
    grid = (B // tile_b,)

    out = pl.pallas_call(
        vcopn_kernel,
        out_shape=jax.ShapeDtypeStruct((B, CLASS_PAD), jnp.float32),
        grid_spec=pltpu.PrefetchScalarGridSpec(
            num_scalar_prefetch=0,
            grid=grid,
            in_specs=[
                pl.BlockSpec((L, tile_b, CT), lambda b: (0, b, 0)),              # x
                pl.BlockSpec((CT, FEATURE_SIZE), lambda b: (0, 0)),              # wbt
                pl.BlockSpec((1, FEATURE_SIZE), lambda b: (0, 0)),               # bb
                pl.BlockSpec((2 * FEATURE_SIZE, FC7_OUT), lambda b: (0, 0)),     # w7
                pl.BlockSpec((1, FC7_OUT), lambda b: (0, 0)),                    # b7
                pl.BlockSpec((FC7_OUT * PAIR_NUM, CLASS_PAD), lambda b: (0, 0)), # w8p
                pl.BlockSpec((1, CLASS_PAD), lambda b: (0, 0)),                  # b8p
            ],
            out_specs=pl.BlockSpec((tile_b, CLASS_PAD), lambda b: (b, 0)),
        ),
        compiler_params=pltpu.CompilerParams(
            dimension_semantics=("parallel",),        # shards batch grid over v7x's 2 TCs
            vmem_limit_bytes=32 * 1024 * 1024,        # explicit; safe on v5e/v6e/v7x
        ),
    )(x, wbt, bb, w7, b7, w8p, b8p)
    return out[:, :CLASS_NUM]


# ----- pure-JAX reference (same math, f32, no Pallas) for a sanity check -------
def vcopn_ref(tup, params):
    B, L, C, T, H, W = tup.shape
    x = tup.reshape(B * L, C, T * H * W).astype(jnp.float32)
    pooled = jnp.mean(x, axis=-1)
    f = jnp.maximum(pooled @ params["wb"] + params["bb"], 0.0).reshape(B, L, FEATURE_SIZE)
    pf = []
    for i in range(L):
        for j in range(i + 1, L):
            cat = jnp.concatenate([f[:, i, :], f[:, j, :]], axis=1)
            pf.append(jnp.maximum(cat @ params["w7"] + params["b7"], 0.0))
    h = jnp.concatenate(pf, axis=1)
    return h @ params["w8"] + params["b8"]


# ----- main ---------------------------------------------------------------------
if __name__ == "__main__":
    key = jax.random.PRNGKey(0)
    k_in, k_wb, k_bb, k_w7, k_b7, k_w8, k_b8 = jax.random.split(key, 7)

    # B=16 so the fused (tile_b % 16 == 0) path is exercised while staying small.
    B, L, C, T, H, W = 16, TUPLE_LEN, 4, 4, 8, 8
    tup = jax.random.normal(k_in, (B, L, C, T, H, W), jnp.float32)

    params = {
        # synthetic base network: global mean pool + Linear(C, FEATURE_SIZE) + ReLU
        "wb": jax.random.normal(k_wb, (C, FEATURE_SIZE), jnp.float32) * 0.1,
        "bb": jax.random.normal(k_bb, (1, FEATURE_SIZE), jnp.float32) * 0.1,
        # fc7: Linear(2*F, 512)
        "w7": jax.random.normal(k_w7, (2 * FEATURE_SIZE, FC7_OUT), jnp.float32) * 0.05,
        "b7": jax.random.normal(k_b7, (1, FC7_OUT), jnp.float32) * 0.05,
        # fc8: Linear(512*pair_num, class_num)
        "w8": jax.random.normal(k_w8, (FC7_OUT * PAIR_NUM, CLASS_NUM), jnp.float32) * 0.02,
        "b8": jax.random.normal(k_b8, (1, CLASS_NUM), jnp.float32) * 0.02,
    }

    fwd = jax.jit(vcopn_forward)
    out = jax.block_until_ready(fwd(tup, params))
    ref = jax.block_until_ready(vcopn_ref(tup, params))
    assert out.shape == (B, CLASS_NUM)
    # bf16 MXU operands -> looser tolerance than the f32 version (per perf review).
    np.testing.assert_allclose(np.asarray(out), np.asarray(ref), rtol=2e-2, atol=2e-2)
    print("KERNEL_OK")
</pallas_src>

<mosaic_0001>
module attributes {stable_mosaic.version = 11 : i64} {
  func.func @vcopn_kernel(%arg0: i32, %arg1: memref<3x16x1024xbf16, #tpu.memory_space<vmem>>, %arg2: memref<1024x32xbf16, #tpu.memory_space<vmem>>, %arg3: memref<1x32xf32, #tpu.memory_space<vmem>>, %arg4: memref<64x512xbf16, #tpu.memory_space<vmem>>, %arg5: memref<1x512xf32, #tpu.memory_space<vmem>>, %arg6: memref<1536x128xbf16, #tpu.memory_space<vmem>>, %arg7: memref<1x128xf32, #tpu.memory_space<vmem>>, %arg8: memref<16x128xf32, #tpu.memory_space<vmem>>) attributes {dimension_semantics = [#tpu.dimension_semantics<parallel>], iteration_bounds = array<i64: 1>, scalar_prefetch = 0 : i64, scratch_operands = 0 : i64, tpu.core_type = #tpu.core_type<tc>, window_params = [{transform_indices = @transform_0, window_bounds = array<i64: 3, 16, 1024>}, {pipeline_mode = #tpu.pipeline_mode<synchronous>, transform_indices = @transform_1, window_bounds = array<i64: 1024, 32>}, {pipeline_mode = #tpu.pipeline_mode<synchronous>, transform_indices = @transform_2, window_bounds = array<i64: 1, 32>}, {pipeline_mode = #tpu.pipeline_mode<synchronous>, transform_indices = @transform_3, window_bounds = array<i64: 64, 512>}, {pipeline_mode = #tpu.pipeline_mode<synchronous>, transform_indices = @transform_4, window_bounds = array<i64: 1, 512>}, {pipeline_mode = #tpu.pipeline_mode<synchronous>, transform_indices = @transform_5, window_bounds = array<i64: 1536, 128>}, {pipeline_mode = #tpu.pipeline_mode<synchronous>, transform_indices = @transform_6, window_bounds = array<i64: 1, 128>}, {transform_indices = @transform_7, window_bounds = array<i64: 16, 128>}]} {
    %c0 = arith.constant 0 : index
    %c0_0 = arith.constant 0 : index
    %0 = vector.load %arg2[%c0, %c0_0] : memref<1024x32xbf16, #tpu.memory_space<vmem>>, vector<1024x32xbf16>
    %c0_1 = arith.constant 0 : index
    %c0_2 = arith.constant 0 : index
    %1 = vector.load %arg3[%c0_1, %c0_2] : memref<1x32xf32, #tpu.memory_space<vmem>>, vector<1x32xf32>
    %c0_3 = arith.constant 0 : index
    %c0_4 = arith.constant 0 : index
    %2 = vector.load %arg4[%c0_3, %c0_4] : memref<64x512xbf16, #tpu.memory_space<vmem>>, vector<32x512xbf16>
    %c32 = arith.constant 32 : index
    %c0_5 = arith.constant 0 : index
    %3 = vector.load %arg4[%c32, %c0_5] : memref<64x512xbf16, #tpu.memory_space<vmem>>, vector<32x512xbf16>
    %c0_6 = arith.constant 0 : index
    %c0_7 = arith.constant 0 : index
    %4 = vector.load %arg5[%c0_6, %c0_7] : memref<1x512xf32, #tpu.memory_space<vmem>>, vector<1x512xf32>
    %c0_8 = arith.constant 0 : index
    %c0_9 = arith.constant 0 : index
    %c0_10 = arith.constant 0 : index
    %5 = vector.load %arg1[%c0_8, %c0_9, %c0_10] : memref<3x16x1024xbf16, #tpu.memory_space<vmem>>, vector<3x16x1024xbf16>
    %6 = vector.shape_cast %5 : vector<3x16x1024xbf16> to vector<48x1024xbf16>
    %cst = arith.constant dense<0.000000e+00> : vector<48x32xf32>
    %7 = tpu.matmul %6, %0, %cst {dimension_numbers = #tpu.dot_dimension_numbers<[1], [0], [0], [1], [0, 0, 1, 1], [], []>} : vector<48x1024xbf16>, vector<1024x32xbf16>, vector<48x32xf32> -> vector<48x32xf32>
    %8 = vector.broadcast %1 : vector<1x32xf32> to vector<48x32xf32>
    %9 = arith.addf %7, %8 : vector<48x32xf32>
    %cst_11 = arith.constant 0.000000e+00 : f32
    %10 = vector.broadcast %cst_11 : f32 to vector<48x32xf32>
    %11 = arith.maximumf %9, %10 : vector<48x32xf32>
    %12 = arith.truncf %11 : vector<48x32xf32> to vector<48x32xbf16>
    %cst_12 = arith.constant dense<0.000000e+00> : vector<48x512xf32>
    %13 = tpu.matmul %12, %2, %cst_12 {dimension_numbers = #tpu.dot_dimension_numbers<[1], [0], [0], [1], [0, 0, 1, 1], [], []>} : vector<48x32xbf16>, vector<32x512xbf16>, vector<48x512xf32> -> vector<48x512xf32>
    %cst_13 = arith.constant dense<0.000000e+00> : vector<48x512xf32>
    %14 = tpu.matmul %12, %3, %cst_13 {dimension_numbers = #tpu.dot_dimension_numbers<[1], [0], [0], [1], [0, 0, 1, 1], [], []>} : vector<48x32xbf16>, vector<32x512xbf16>, vector<48x512xf32> -> vector<48x512xf32>
    %15 = vector.extract_strided_slice %13 {offsets = [0, 0], sizes = [16, 512], strides = [1, 1]} : vector<48x512xf32> to vector<16x512xf32>
    %16 = vector.extract_strided_slice %13 {offsets = [16, 0], sizes = [16, 512], strides = [1, 1]} : vector<48x512xf32> to vector<16x512xf32>
    %17 = vector.extract_strided_slice %14 {offsets = [16, 0], sizes = [16, 512], strides = [1, 1]} : vector<48x512xf32> to vector<16x512xf32>
    %18 = vector.extract_strided_slice %14 {offsets = [32, 0], sizes = [16, 512], strides = [1, 1]} : vector<48x512xf32> to vector<16x512xf32>
    %cst_14 = arith.constant 0.000000e+00 : f32
    %19 = vector.broadcast %cst_14 : f32 to vector<16x128xf32>
    %20 = arith.addf %15, %17 : vector<16x512xf32>
    %21 = vector.broadcast %4 : vector<1x512xf32> to vector<16x512xf32>
    %22 = arith.addf %20, %21 : vector<16x512xf32>
    %cst_15 = arith.constant 0.000000e+00 : f32
    %23 = vector.broadcast %cst_15 : f32 to vector<16x512xf32>
    %24 = arith.maximumf %22, %23 : vector<16x512xf32>
    %25 = arith.truncf %24 : vector<16x512xf32> to vector<16x512xbf16>
    %c0_16 = arith.constant 0 : index
    %c0_17 = arith.constant 0 : index
    %26 = vector.load %arg6[%c0_16, %c0_17] : memref<1536x128xbf16, #tpu.memory_space<vmem>>, vector<512x128xbf16>
    %cst_18 = arith.constant dense<0.000000e+00> : vector<16x128xf32>
    %27 = tpu.matmul %25, %26, %cst_18 {dimension_numbers = #tpu.dot_dimension_numbers<[1], [0], [0], [1], [0, 0, 1, 1], [], []>} : vector<16x512xbf16>, vector<512x128xbf16>, vector<16x128xf32> -> vector<16x128xf32>
    %28 = arith.addf %19, %27 : vector<16x128xf32>
    %29 = arith.addf %15, %18 : vector<16x512xf32>
    %30 = vector.broadcast %4 : vector<1x512xf32> to vector<16x512xf32>
    %31 = arith.addf %29, %30 : vector<16x512xf32>
    %cst_19 = arith.constant 0.000000e+00 : f32
    %32 = vector.broadcast %cst_19 : f32 to vector<16x512xf32>
    %33 = arith.maximumf %31, %32 : vector<16x512xf32>
    %34 = arith.truncf %33 : vector<16x512xf32> to vector<16x512xbf16>
    %c512 = arith.constant 512 : index
    %c0_20 = arith.constant 0 : index
    %35 = vector.load %arg6[%c512, %c0_20] : memref<1536x128xbf16, #tpu.memory_space<vmem>>, vector<512x128xbf16>
    %cst_21 = arith.constant dense<0.000000e+00> : vector<16x128xf32>
    %36 = tpu.matmul %34, %35, %cst_21 {dimension_numbers = #tpu.dot_dimension_numbers<[1], [0], [0], [1], [0, 0, 1, 1], [], []>} : vector<16x512xbf16>, vector<512x128xbf16>, vector<16x128xf32> -> vector<16x128xf32>
    %37 = arith.addf %28, %36 : vector<16x128xf32>
    %38 = arith.addf %16, %18 : vector<16x512xf32>
    %39 = vector.broadcast %4 : vector<1x512xf32> to vector<16x512xf32>
    %40 = arith.addf %38, %39 : vector<16x512xf32>
    %cst_22 = arith.constant 0.000000e+00 : f32
    %41 = vector.broadcast %cst_22 : f32 to vector<16x512xf32>
    %42 = arith.maximumf %40, %41 : vector<16x512xf32>
    %43 = arith.truncf %42 : vector<16x512xf32> to vector<16x512xbf16>
    %c1024 = arith.constant 1024 : index
    %c0_23 = arith.constant 0 : index
    %44 = vector.load %arg6[%c1024, %c0_23] : memref<1536x128xbf16, #tpu.memory_space<vmem>>, vector<512x128xbf16>
    %cst_24 = arith.constant dense<0.000000e+00> : vector<16x128xf32>
    %45 = tpu.matmul %43, %44, %cst_24 {dimension_numbers = #tpu.dot_dimension_numbers<[1], [0], [0], [1], [0, 0, 1, 1], [], []>} : vector<16x512xbf16>, vector<512x128xbf16>, vector<16x128xf32> -> vector<16x128xf32>
    %46 = arith.addf %37, %45 : vector<16x128xf32>
    %c0_25 = arith.constant 0 : index
    %c0_26 = arith.constant 0 : index
    %47 = vector.load %arg7[%c0_25, %c0_26] : memref<1x128xf32, #tpu.memory_space<vmem>>, vector<1x128xf32>
    %48 = vector.broadcast %47 : vector<1x128xf32> to vector<16x128xf32>
    %49 = arith.addf %46, %48 : vector<16x128xf32>
    %c0_27 = arith.constant 0 : index
    %c0_28 = arith.constant 0 : index
    %50 = vector.load %arg8[%c0_27, %c0_28] : memref<16x128xf32, #tpu.memory_space<vmem>>, vector<16x128xf32>
    tpu.vector_store %arg8[%c0_27, %c0_28], %49 {strides = array<i32>} : memref<16x128xf32, #tpu.memory_space<vmem>>, vector<16x128xf32>,
    return
  }
  func.func @transform_0(%arg0: i32) -> (i32, i32, i32) {
    %c0_i32 = arith.constant 0 : i32
    %c0_i32_0 = arith.constant 0 : i32
    %c0_i32_1 = arith.constant 0 : i32
    return %c0_i32, %arg0, %c0_i32_0 : i32, i32, i32
  }
  func.func @transform_1(%arg0: i32) -> (i32, i32) {
    %c0_i32 = arith.constant 0 : i32
    %c0_i32_0 = arith.constant 0 : i32
    %c0_i32_1 = arith.constant 0 : i32
    return %c0_i32, %c0_i32_0 : i32, i32
  }
  func.func @transform_2(%arg0: i32) -> (i32, i32) {
    %c0_i32 = arith.constant 0 : i32
    %c0_i32_0 = arith.constant 0 : i32
    %c0_i32_1 = arith.constant 0 : i32
    return %c0_i32, %c0_i32_0 : i32, i32
  }
  func.func @transform_3(%arg0: i32) -> (i32, i32) {
    %c0_i32 = arith.constant 0 : i32
    %c0_i32_0 = arith.constant 0 : i32
    %c0_i32_1 = arith.constant 0 : i32
    return %c0_i32, %c0_i32_0 : i32, i32
  }
  func.func @transform_4(%arg0: i32) -> (i32, i32) {
    %c0_i32 = arith.constant 0 : i32
    %c0_i32_0 = arith.constant 0 : i32
    %c0_i32_1 = arith.constant 0 : i32
    return %c0_i32, %c0_i32_0 : i32, i32
  }
  func.func @transform_5(%arg0: i32) -> (i32, i32) {
    %c0_i32 = arith.constant 0 : i32
    %c0_i32_0 = arith.constant 0 : i32
    %c0_i32_1 = arith.constant 0 : i32
    return %c0_i32, %c0_i32_0 : i32, i32
  }
  func.func @transform_6(%arg0: i32) -> (i32, i32) {
    %c0_i32 = arith.constant 0 : i32
    %c0_i32_0 = arith.constant 0 : i32
    %c0_i32_1 = arith.constant 0 : i32
    return %c0_i32, %c0_i32_0 : i32, i32
  }
  func.func @transform_7(%arg0: i32) -> (i32, i32) {
    %c0_i32 = arith.constant 0 : i32
    %c0_i32_0 = arith.constant 0 : i32
    return %arg0, %c0_i32 : i32, i32
  }
}

</mosaic_0001>

<llo_original>
// kernel: vcopn_forward.1
$region0: #{vcopn_forward.1}
  #allocation0 [shape = 'u32[]', space=smem, size = 0x4, offset = 0x4, fixed_abs, tag = 'smem constant byte address 0x4 - core index']
  #allocation1 [shape = 'u32[144,128]{1,0:T(1,128)}', space=vmem, size = 0x12000, scoped, tag = 'internal scratch']
  %s0 = inlined_call_operand.vmem [shape: bf16[3,16,1024], index: 0, kind: input, shape index: {}]
  %s1 = inlined_call_operand.vmem [shape: bf16[1024,32], index: 1, kind: input, shape index: {}]
  %s2 = inlined_call_operand.vmem [shape: f32[1,32], index: 2, kind: input, shape index: {}]
  %s3 = inlined_call_operand.vmem [shape: bf16[64,512], index: 3, kind: input, shape index: {}]
  %s4 = inlined_call_operand.vmem [shape: f32[1,512], index: 4, kind: input, shape index: {}]
  %s5 = inlined_call_operand.vmem [shape: bf16[1536,128], index: 5, kind: input, shape index: {}]
  %s6 = inlined_call_operand.vmem [shape: f32[1,128], index: 6, kind: input, shape index: {}]
  %s7 = inlined_call_operand.vmem [shape: f32[16,128], index: 7, kind: output, shape index: {}]
  %s8 = sld [smem:[#allocation0]]
  $region38: #{vcopn_forward.1} parent=0
    _
  %s10 = ssub.s32 1, %s8
  %s11 = scalar_select 0, %s10, %s8
  // Predicated region
  $region2: #{vcopn_forward.1} parent=0 // pred_check
    _
  $region3: #{vcopn_forward.1} parent=0 // pred_check_branch
    %13 = sbr.rel (0) target = $region5
  $region4: #{vcopn_forward.1} parent=0 // pred_region
    _
  $region5: #{vcopn_forward.1} parent=0 // pred_fallthru
    _
  // Predicated region
  $region6: #{vcopn_forward.1} parent=0 // pred_check
    _
  $region7: #{vcopn_forward.1} parent=0 // pred_check_branch
    %15 = sbr.rel (0) target = $region9
  $region8: #{vcopn_forward.1} parent=0 // pred_region
    _
  $region9: #{vcopn_forward.1} parent=0 // pred_fallthru
    _
  // Predicated region
  $region10: #{vcopn_forward.1} parent=0 // pred_check
    _
  $region11: #{vcopn_forward.1} parent=0 // pred_check_branch
    %17 = sbr.rel (0) target = $region13
  $region12: #{vcopn_forward.1} parent=0 // pred_region
    _
  $region13: #{vcopn_forward.1} parent=0 // pred_fallthru
    _
  // Predicated region
  $region14: #{vcopn_forward.1} parent=0 // pred_check
    _
  $region15: #{vcopn_forward.1} parent=0 // pred_check_branch
    %19 = sbr.rel (0) target = $region17
  $region16: #{vcopn_forward.1} parent=0 // pred_region
    _
  $region17: #{vcopn_forward.1} parent=0 // pred_fallthru
    _
  // Predicated region
  $region18: #{vcopn_forward.1} parent=0 // pred_check
    _
  $region19: #{vcopn_forward.1} parent=0 // pred_check_branch
    %21 = sbr.rel (0) target = $region21
  $region20: #{vcopn_forward.1} parent=0 // pred_region
    _
  $region21: #{vcopn_forward.1} parent=0 // pred_fallthru
    _
  // Predicated region
  $region22: #{vcopn_forward.1} parent=0 // pred_check
    _
  $region23: #{vcopn_forward.1} parent=0 // pred_check_branch
    %23 = sbr.rel (0) target = $region25
  $region24: #{vcopn_forward.1} parent=0 // pred_region
    _
  $region25: #{vcopn_forward.1} parent=0 // pred_fallthru
    _
  // Predicated region
  $region26: #{vcopn_forward.1} parent=0 // pred_check
    _
  $region27: #{vcopn_forward.1} parent=0 // pred_check_branch
    %25 = sbr.rel (0) target = $region29
  $region28: #{vcopn_forward.1} parent=0 // pred_region
    _
  $region29: #{vcopn_forward.1} parent=0 // pred_fallthru
    _
  %v27 = vld [vmem:[%s1] sm:$0xf]
  %v28 = vld [vmem:[%s1 + $0x4] sm:$0xf]
  %v29 = vld [vmem:[%s1 + $0x8] sm:$0xf]
  %v30 = vld [vmem:[%s1 + $0xc] sm:$0xf]
  %v31 = vld [vmem:[%s1 + $0x10] sm:$0xf]
  %v32 = vld [vmem:[%s1 + $0x14] sm:$0xf]
  %v33 = vld [vmem:[%s1 + $0x18] sm:$0xf]
  %v34 = vld [vmem:[%s1 + $0x1c] sm:$0xf]
  %v35 = vld [vmem:[%s1 + $0x20] sm:$0xf]
  %v36 = vld [vmem:[%s1 + $0x24] sm:$0xf]
  %v37 = vld [vmem:[%s1 + $0x28] sm:$0xf]
  %v38 = vld [vmem:[%s1 + $0x2c] sm:$0xf]
  %v39 = vld [vmem:[%s1 + $0x30] sm:$0xf]
  %v40 = vld [vmem:[%s1 + $0x34] sm:$0xf]
  %v41 = vld [vmem:[%s1 + $0x38] sm:$0xf]
  %v42 = vld [vmem:[%s1 + $0x3c] sm:$0xf]
  %v43 = vld [vmem:[%s1 + $0x40] sm:$0xf]
  %v44 = vld [vmem:[%s1 + $0x44] sm:$0xf]
  %v45 = vld [vmem:[%s1 + $0x48] sm:$0xf]
  %v46 = vld [vmem:[%s1 + $0x4c] sm:$0xf]
  %v47 = vld [vmem:[%s1 + $0x50] sm:$0xf]
  %v48 = vld [vmem:[%s1 + $0x54] sm:$0xf]
  %v49 = vld [vmem:[%s1 + $0x58] sm:$0xf]
  %v50 = vld [vmem:[%s1 + $0x5c] sm:$0xf]
  %v51 = vld [vmem:[%s1 + $0x60] sm:$0xf]
  %v52 = vld [vmem:[%s1 + $0x64] sm:$0xf]
  %v53 = vld [vmem:[%s1 + $0x68] sm:$0xf]
  %v54 = vld [vmem:[%s1 + $0x6c] sm:$0xf]
  %v55 = vld [vmem:[%s1 + $0x70] sm:$0xf]
  %v56 = vld [vmem:[%s1 + $0x74] sm:$0xf]
  %v57 = vld [vmem:[%s1 + $0x78] sm:$0xf]
  %v58 = vld [vmem:[%s1 + $0x7c] sm:$0xf]
  %v59 = vld [vmem:[%s1 + $0x80] sm:$0xf]
  %v60 = vld [vmem:[%s1 + $0x84] sm:$0xf]
  %v61 = vld [vmem:[%s1 + $0x88] sm:$0xf]
  %v62 = vld [vmem:[%s1 + $0x8c] sm:$0xf]
  %v63 = vld [vmem:[%s1 + $0x90] sm:$0xf]
  %v64 = vld [vmem:[%s1 + $0x94] sm:$0xf]
  %v65 = vld [vmem:[%s1 + $0x98] sm:$0xf]
  %v66 = vld [vmem:[%s1 + $0x9c] sm:$0xf]
  %v67 = vld [vmem:[%s1 + $0xa0] sm:$0xf]
  %v68 = vld [vmem:[%s1 + $0xa4] sm:$0xf]
  %v69 = vld [vmem:[%s1 + $0xa8] sm:$0xf]
  %v70 = vld [vmem:[%s1 + $0xac] sm:$0xf]
  %v71 = vld [vmem:[%s1 + $0xb0] sm:$0xf]
  %v72 = vld [vmem:[%s1 + $0xb4] sm:$0xf]
  %v73 = vld [vmem:[%s1 + $0xb8] sm:$0xf]
  %v74 = vld [vmem:[%s1 + $0xbc] sm:$0xf]
  %v75 = vld [vmem:[%s1 + $0xc0] sm:$0xf]
  %v76 = vld [vmem:[%s1 + $0xc4] sm:$0xf]
  %v77 = vld [vmem:[%s1 + $0xc8] sm:$0xf]
  %v78 = vld [vmem:[%s1 + $0xcc] sm:$0xf]
  %v79 = vld [vmem:[%s1 + $0xd0] sm:$0xf]
  %v80 = vld [vmem:[%s1 + $0xd4] sm:$0xf]
  %v81 = vld [vmem:[%s1 + $0xd8] sm:$0xf]
  %v82 = vld [vmem:[%s1 + $0xdc] sm:$0xf]
  %v83 = vld [vmem:[%s1 + $0xe0] sm:$0xf]
  %v84 = vld [vmem:[%s1 + $0xe4] sm:$0xf]
  %v85 = vld [vmem:[%s1 + $0xe8] sm:$0xf]
  %v86 = vld [vmem:[%s1 + $0xec] sm:$0xf]
  %v87 = vld [vmem:[%s1 + $0xf0] sm:$0xf]
  %v88 = vld [vmem:[%s1 + $0xf4] sm:$0xf]
  %v89 = vld [vmem:[%s1 + $0xf8] sm:$0xf]
  %v90 = vld [vmem:[%s1 + $0xfc] sm:$0xf]
  %v91 = vld [vmem:[%s1 + $0x100] sm:$0xf]
  %v92 = vld [vmem:[%s1 + $0x104] sm:$0xf]
  %v93 = vld [vmem:[%s1 + $0x108] sm:$0xf]
  %v94 = vld [vmem:[%s1 + $0x10c] sm:$0xf]
  %v95 = vld [vmem:[%s1 + $0x110] sm:$0xf]
  %v96 = vld [vmem:[%s1 + $0x114] sm:$0xf]
  %v97 = vld [vmem:[%s1 + $0x118] sm:$0xf]
  %v98 = vld [vmem:[%s1 + $0x11c] sm:$0xf]
  %v99 = vld [vmem:[%s1 + $0x120] sm:$0xf]
  %v100 = vld [vmem:[%s1 + $0x124] sm:$0xf]
  %v101 = vld [vmem:[%s1 + $0x128] sm:$0xf]
  %v102 = vld [vmem:[%s1 + $0x12c] sm:$0xf]
  %v103 = vld [vmem:[%s1 + $0x130] sm:$0xf]
  %v104 = vld [vmem:[%s1 + $0x134] sm:$0xf]
  %v105 = vld [vmem:[%s1 + $0x138] sm:$0xf]
  %v106 = vld [vmem:[%s1 + $0x13c] sm:$0xf]
  %v107 = vld [vmem:[%s1 + $0x140] sm:$0xf]
  %v108 = vld [vmem:[%s1 + $0x144] sm:$0xf]
  %v109 = vld [vmem:[%s1 + $0x148] sm:$0xf]
  %v110 = vld [vmem:[%s1 + $0x14c] sm:$0xf]
  %v111 = vld [vmem:[%s1 + $0x150] sm:$0xf]
  %v112 = vld [vmem:[%s1 + $0x154] sm:$0xf]
  %v113 = vld [vmem:[%s1 + $0x158] sm:$0xf]
  %v114 = vld [vmem:[%s1 + $0x15c] sm:$0xf]
  %v115 = vld [vmem:[%s1 + $0x160] sm:$0xf]
  %v116 = vld [vmem:[%s1 + $0x164] sm:$0xf]
  %v117 = vld [vmem:[%s1 + $0x168] sm:$0xf]
  %v118 = vld [vmem:[%s1 + $0x16c] sm:$0xf]
  %v119 = vld [vmem:[%s1 + $0x170] sm:$0xf]
  %v120 = vld [vmem:[%s1 + $0x174] sm:$0xf]
  %v121 = vld [vmem:[%s1 + $0x178] sm:$0xf]
  %v122 = vld [vmem:[%s1 + $0x17c] sm:$0xf]
  %v123 = vld [vmem:[%s1 + $0x180] sm:$0xf]
  %v124 = vld [vmem:[%s1 + $0x184] sm:$0xf]
  %v125 = vld [vmem:[%s1 + $0x188] sm:$0xf]
  %v126 = vld [vmem:[%s1 + $0x18c] sm:$0xf]
  %v127 = vld [vmem:[%s1 + $0x190] sm:$0xf]
  %v128 = vld [vmem:[%s1 + $0x194] sm:$0xf]
  %v129 = vld [vmem:[%s1 + $0x198] sm:$0xf]
  %v130 = vld [vmem:[%s1 + $0x19c] sm:$0xf]
  %v131 = vld [vmem:[%s1 + $0x1a0] sm:$0xf]
  %v132 = vld [vmem:[%s1 + $0x1a4] sm:$0xf]
  %v133 = vld [vmem:[%s1 + $0x1a8] sm:$0xf]
  %v134 = vld [vmem:[%s1 + $0x1ac] sm:$0xf]
  %v135 = vld [vmem:[%s1 + $0x1b0] sm:$0xf]
  %v136 = vld [vmem:[%s1 + $0x1b4] sm:$0xf]
  %v137 = vld [vmem:[%s1 + $0x1b8] sm:$0xf]
  %v138 = vld [vmem:[%s1 + $0x1bc] sm:$0xf]
  %v139 = vld [vmem:[%s1 + $0x1c0] sm:$0xf]
  %v140 = vld [vmem:[%s1 + $0x1c4] sm:$0xf]
  %v141 = vld [vmem:[%s1 + $0x1c8] sm:$0xf]
  %v142 = vld [vmem:[%s1 + $0x1cc] sm:$0xf]
  %v143 = vld [vmem:[%s1 + $0x1d0] sm:$0xf]
  %v144 = vld [vmem:[%s1 + $0x1d4] sm:$0xf]
  %v145 = vld [vmem:[%s1 + $0x1d8] sm:$0xf]
  %v146 = vld [vmem:[%s1 + $0x1dc] sm:$0xf]
  %v147 = vld [vmem:[%s1 + $0x1e0] sm:$0xf]
  %v148 = vld [vmem:[%s1 + $0x1e4] sm:$0xf]
  %v149 = vld [vmem:[%s1 + $0x1e8] sm:$0xf]
  %v150 = vld [vmem:[%s1 + $0x1ec] sm:$0xf]
  %v151 = vld [vmem:[%s1 + $0x1f0] sm:$0xf]
  %v152 = vld [vmem:[%s1 + $0x1f4] sm:$0xf]
  %v153 = vld [vmem:[%s1 + $0x1f8] sm:$0xf]
  %v154 = vld [vmem:[%s1 + $0x1fc] sm:$0xf]
  %v155 = vld [vmem:[%s2] sm:$0x1]
  %v156 = vld [vmem:[%s3] sm:$0xff]
  %v157 = vld [vmem:[%s3 + $0x8] sm:$0xff]
  %v158 = vld [vmem:[%s3 + $0x10] sm:$0xff]
  %v159 = vld [vmem:[%s3 + $0x18] sm:$0xff]
  %v160 = vld [vmem:[%s3 + $0x20] sm:$0xff]
  %v161 = vld [vmem:[%s3 + $0x28] sm:$0xff]
  %v162 = vld [vmem:[%s3 + $0x30] sm:$0xff]
  %v163 = vld [vmem:[%s3 + $0x38] sm:$0xff]
  %v164 = vld [vmem:[%s3 + $0x40] sm:$0xff]
  %v165 = vld [vmem:[%s3 + $0x48] sm:$0xff]
  %v166 = vld [vmem:[%s3 + $0x50] sm:$0xff]
  %v167 = vld [vmem:[%s3 + $0x58] sm:$0xff]
  %v168 = vld [vmem:[%s3 + $0x60] sm:$0xff]
  %v169 = vld [vmem:[%s3 + $0x68] sm:$0xff]
  %v170 = vld [vmem:[%s3 + $0x70] sm:$0xff]
  %v171 = vld [vmem:[%s3 + $0x78] sm:$0xff]
  %v172 = vld [vmem:[%s4] sm:$0xf]
  %v173 = vld [vmem:[%s0] sm:$0xff]
  %v174 = vld [vmem:[%s0 + $0x8] sm:$0xff]
  %v175 = vld [vmem:[%s0 + $0x10] sm:$0xff]
  %v176 = vld [vmem:[%s0 + $0x18] sm:$0xff]
  %v177 = vld [vmem:[%s0 + $0x20] sm:$0xff]
  %v178 = vld [vmem:[%s0 + $0x28] sm:$0xff]
  %v179 = vld [vmem:[%s0 + $0x30] sm:$0xff]
  %v180 = vld [vmem:[%s0 + $0x38] sm:$0xff]
  %v181 = vld [vmem:[%s0 + $0x40] sm:$0xff]
  %v182 = vld [vmem:[%s0 + $0x48] sm:$0xff]
  %v183 = vld [vmem:[%s0 + $0x50] sm:$0xff]
  %v184 = vld [vmem:[%s0 + $0x58] sm:$0xff]
  %v185 = vld [vmem:[%s0 + $0x60] sm:$0xff]
  %v186 = vld [vmem:[%s0 + $0x68] sm:$0xff]
  %v187 = vld [vmem:[%s0 + $0x70] sm:$0xff]
  %v188 = vld [vmem:[%s0 + $0x78] sm:$0xff]
  %v189 = vld [vmem:[%s0 + $0x80] sm:$0xff]
  %v190 = vld [vmem:[%s0 + $0x88] sm:$0xff]
  %v191 = vld [vmem:[%s0 + $0x90] sm:$0xff]
  %v192 = vld [vmem:[%s0 + $0x98] sm:$0xff]
  %v193 = vld [vmem:[%s0 + $0xa0] sm:$0xff]
  %v194 = vld [vmem:[%s0 + $0xa8] sm:$0xff]
  %v195 = vld [vmem:[%s0 + $0xb0] sm:$0xff]
  %v196 = vld [vmem:[%s0 + $0xb8] sm:$0xff]
  %v198 = vlaneseq
  %v199 = vshrl.u32 %v198, 7
  %v200 = vsub.s32 0, %v199
  %v201 = vrot.slane %v155, %v200
  %v227 = vunpack.c.l.b16 %v173
  %v228 = vunpack.c.h.b16 %v173
  %v229 = vunpack.c.l.b16 %v174
  %v230 = vunpack.c.h.b16 %v174
  %v231 = vunpack.c.l.b16 %v175
  %v232 = vunpack.c.h.b16 %v175
  %v233 = vunpack.c.l.b16 %v176
  %v234 = vunpack.c.h.b16 %v176
  %v235 = vunpack.c.l.b16 %v177
  %v236 = vunpack.c.h.b16 %v177
  %v237 = vunpack.c.l.b16 %v178
  %v238 = vunpack.c.h.b16 %v178
  %v239 = vunpack.c.l.b16 %v179
  %v240 = vunpack.c.h.b16 %v179
  %v241 = vunpack.c.l.b16 %v180
  %v242 = vunpack.c.h.b16 %v180
  %v243 = vunpack.c.l.b16 %v181
  %v244 = vunpack.c.h.b16 %v181
  %v245 = vunpack.c.l.b16 %v182
  %v246 = vunpack.c.h.b16 %v182
  %v247 = vunpack.c.l.b16 %v183
  %v248 = vunpack.c.h.b16 %v183
  %v249 = vunpack.c.l.b16 %v184
  %v250 = vunpack.c.h.b16 %v184
  %v251 = vunpack.c.l.b16 %v185
  %v252 = vunpack.c.h.b16 %v185
  %v253 = vunpack.c.l.b16 %v186
  %v254 = vunpack.c.h.b16 %v186
  %v255 = vunpack.c.l.b16 %v187
  %v256 = vunpack.c.h.b16 %v187
  %v257 = vunpack.c.l.b16 %v188
  %v258 = vunpack.c.h.b16 %v188
  %v259 = vunpack.c.l.b16 %v189
  %v260 = vunpack.c.h.b16 %v189
  %v261 = vunpack.c.l.b16 %v190
  %v262 = vunpack.c.h.b16 %v190
  %v263 = vunpack.c.l.b16 %v191
  %v264 = vunpack.c.h.b16 %v191
  %v265 = vunpack.c.l.b16 %v192
  %v266 = vunpack.c.h.b16 %v192
  %v267 = vunpack.c.l.b16 %v193
  %v268 = vunpack.c.h.b16 %v193
  %v269 = vunpack.c.l.b16 %v194
  %v270 = vunpack.c.h.b16 %v194
  %v271 = vunpack.c.l.b16 %v195
  %v272 = vunpack.c.h.b16 %v195
  %v273 = vunpack.c.l.b16 %v196
  %v274 = vunpack.c.h.b16 %v196
  %v275 = vpack.c.b16 %v235, %v227
  %v276 = vpack.c.b16 %v236, %v228
  %v277 = vpack.c.b16 %v237, %v229
  %v278 = vpack.c.b16 %v238, %v230
  %v279 = vpack.c.b16 %v239, %v231
  %v280 = vpack.c.b16 %v240, %v232
  %v281 = vpack.c.b16 %v241, %v233
  %v282 = vpack.c.b16 %v242, %v234
  %v283 = vpack.c.b16 %v251, %v243
  %v284 = vpack.c.b16 %v252, %v244
  %v285 = vpack.c.b16 %v253, %v245
  %v286 = vpack.c.b16 %v254, %v246
  %v287 = vpack.c.b16 %v255, %v247
  %v288 = vpack.c.b16 %v256, %v248
  %v289 = vpack.c.b16 %v257, %v249
  %v290 = vpack.c.b16 %v258, %v250
  %v291 = vpack.c.b16 %v267, %v259
  %v292 = vpack.c.b16 %v268, %v260
  %v293 = vpack.c.b16 %v269, %v261
  %v294 = vpack.c.b16 %v270, %v262
  %v295 = vpack.c.b16 %v271, %v263
  %v296 = vpack.c.b16 %v272, %v264
  %v297 = vpack.c.b16 %v273, %v265
  %v298 = vpack.c.b16 %v274, %v266
  %v451 = vunpack.c.l.b16 %v27
  %v452 = vunpack.c.l.b16 %v28
  %v453 = vunpack.c.l.b16 %v29
  %v454 = vunpack.c.l.b16 %v30
  %v455 = vunpack.c.l.b16 %v31
  %v456 = vunpack.c.l.b16 %v32
  %v457 = vunpack.c.l.b16 %v33
  %v458 = vunpack.c.l.b16 %v34
  %v459 = vunpack.c.l.b16 %v35
  %v460 = vunpack.c.l.b16 %v36
  %v461 = vunpack.c.l.b16 %v37
  %v462 = vunpack.c.l.b16 %v38
  %v463 = vunpack.c.l.b16 %v39
  %v464 = vunpack.c.l.b16 %v40
  %v465 = vunpack.c.l.b16 %v41
  %v466 = vunpack.c.l.b16 %v42
  %v467 = vunpack.c.l.b16 %v43
  %v468 = vunpack.c.l.b16 %v44
  %v469 = vunpack.c.l.b16 %v45
  %v470 = vunpack.c.l.b16 %v46
  %v471 = vunpack.c.l.b16 %v47
  %v472 = vunpack.c.l.b16 %v48
  %v473 = vunpack.c.l.b16 %v49
  %v474 = vunpack.c.l.b16 %v50
  %v475 = vunpack.c.l.b16 %v51
  %v476 = vunpack.c.l.b16 %v52
  %v477 = vunpack.c.l.b16 %v53
  %v478 = vunpack.c.l.b16 %v54
  %v479 = vunpack.c.l.b16 %v55
  %v480 = vunpack.c.l.b16 %v56
  %v481 = vunpack.c.l.b16 %v57
  %v482 = vunpack.c.l.b16 %v58
  %v483 = vunpack.c.l.b16 %v59
  %v484 = vunpack.c.l.b16 %v60
  %v485 = vunpack.c.l.b16 %v61
  %v486 = vunpack.c.l.b16 %v62
  %v487 = vunpack.c.l.b16 %v63
  %v488 = vunpack.c.l.b16 %v64
  %v489 = vunpack.c.l.b16 %v65
  %v490 = vunpack.c.l.b16 %v66
  %v491 = vunpack.c.l.b16 %v67
  %v492 = vunpack.c.l.b16 %v68
  %v493 = vunpack.c.l.b16 %v69
  %v494 = vunpack.c.l.b16 %v70
  %v495 = vunpack.c.l.b16 %v71
  %v496 = vunpack.c.l.b16 %v72
  %v497 = vunpack.c.l.b16 %v73
  %v498 = vunpack.c.l.b16 %v74
  %v499 = vunpack.c.l.b16 %v75
  %v500 = vunpack.c.l.b16 %v76
  %v501 = vunpack.c.l.b16 %v77
  %v502 = vunpack.c.l.b16 %v78
  %v503 = vunpack.c.l.b16 %v79
  %v504 = vunpack.c.l.b16 %v80
  %v505 = vunpack.c.l.b16 %v81
  %v506 = vunpack.c.l.b16 %v82
  %v507 = vunpack.c.l.b16 %v83
  %v508 = vunpack.c.l.b16 %v84
  %v509 = vunpack.c.l.b16 %v85
  %v510 = vunpack.c.l.b16 %v86
  %v511 = vunpack.c.l.b16 %v87
  %v512 = vunpack.c.l.b16 %v88
  %v513 = vunpack.c.l.b16 %v89
  %v514 = vunpack.c.l.b16 %v90
  %v515 = vunpack.c.l.b16 %v91
  %v516 = vunpack.c.l.b16 %v92
  %v517 = vunpack.c.l.b16 %v93
  %v518 = vunpack.c.l.b16 %v94
  %v519 = vunpack.c.l.b16 %v95
  %v520 = vunpack.c.l.b16 %v96
  %v521 = vunpack.c.l.b16 %v97
  %v522 = vunpack.c.l.b16 %v98
  %v523 = vunpack.c.l.b16 %v99
  %v524 = vunpack.c.l.b16 %v100
  %v525 = vunpack.c.l.b16 %v101
  %v526 = vunpack.c.l.b16 %v102
  %v527 = vunpack.c.l.b16 %v103
  %v528 = vunpack.c.l.b16 %v104
  %v529 = vunpack.c.l.b16 %v105
  %v530 = vunpack.c.l.b16 %v106
  %v531 = vunpack.c.l.b16 %v107
  %v532 = vunpack.c.l.b16 %v108
  %v533 = vunpack.c.l.b16 %v109
  %v534 = vunpack.c.l.b16 %v110
  %v535 = vunpack.c.l.b16 %v111
  %v536 = vunpack.c.l.b16 %v112
  %v537 = vunpack.c.l.b16 %v113
  %v538 = vunpack.c.l.b16 %v114
  %v539 = vunpack.c.l.b16 %v115
  %v540 = vunpack.c.l.b16 %v116
  %v541 = vunpack.c.l.b16 %v117
  %v542 = vunpack.c.l.b16 %v118
  %v543 = vunpack.c.l.b16 %v119
  %v544 = vunpack.c.l.b16 %v120
  %v545 = vunpack.c.l.b16 %v121
  %v546 = vunpack.c.l.b16 %v122
  %v547 = vunpack.c.l.b16 %v123
  %v548 = vunpack.c.l.b16 %v124
  %v549 = vunpack.c.l.b16 %v125
  %v550 = vunpack.c.l.b16 %v126
  %v551 = vunpack.c.l.b16 %v127
  %v552 = vunpack.c.l.b16 %v128
  %v553 = vunpack.c.l.b16 %v129
  %v554 = vunpack.c.l.b16 %v130
  %v555 = vunpack.c.l.b16 %v131
  %v556 = vunpack.c.l.b16 %v132
  %v557 = vunpack.c.l.b16 %v133
  %v558 = vunpack.c.l.b16 %v134
  %v559 = vunpack.c.l.b16 %v135
  %v560 = vunpack.c.l.b16 %v136
  %v561 = vunpack.c.l.b16 %v137
  %v562 = vunpack.c.l.b16 %v138
  %v563 = vunpack.c.l.b16 %v139
  %v564 = vunpack.c.l.b16 %v140
  %v565 = vunpack.c.l.b16 %v141
  %v566 = vunpack.c.l.b16 %v142
  %v567 = vunpack.c.l.b16 %v143
  %v568 = vunpack.c.l.b16 %v144
  %v569 = vunpack.c.l.b16 %v145
  %v570 = vunpack.c.l.b16 %v146
  %v571 = vunpack.c.l.b16 %v147
  %v572 = vunpack.c.l.b16 %v148
  %v573 = vunpack.c.l.b16 %v149
  %v574 = vunpack.c.l.b16 %v150
  %v575 = vunpack.c.l.b16 %v151
  %v576 = vunpack.c.l.b16 %v152
  %v577 = vunpack.c.l.b16 %v153
  %v578 = vunpack.c.l.b16 %v154
  %v579 = vpack.c.b16 %v452, %v451
  %v580 = vpack.c.b16 %v454, %v453
  %v581 = vpack.c.b16 %v456, %v455
  %v582 = vpack.c.b16 %v458, %v457
  %v583 = vpack.c.b16 %v460, %v459
  %v584 = vpack.c.b16 %v462, %v461
  %v585 = vpack.c.b16 %v464, %v463
  %v586 = vpack.c.b16 %v466, %v465
  %v587 = vpack.c.b16 %v468, %v467
  %v588 = vpack.c.b16 %v470, %v469
  %v589 = vpack.c.b16 %v472, %v471
  %v590 = vpack.c.b16 %v474, %v473
  %v591 = vpack.c.b16 %v476, %v475
  %v592 = vpack.c.b16 %v478, %v477
  %v593 = vpack.c.b16 %v480, %v479
  %v594 = vpack.c.b16 %v482, %v481
  %v595 = vpack.c.b16 %v484, %v483
  %v596 = vpack.c.b16 %v486, %v485
  %v597 = vpack.c.b16 %v488, %v487
  %v598 = vpack.c.b16 %v490, %v489
  %v599 = vpack.c.b16 %v492, %v491
  %v600 = vpack.c.b16 %v494, %v493
  %v601 = vpack.c.b16 %v496, %v495
  %v602 = vpack.c.b16 %v498, %v497
  %v603 = vpack.c.b16 %v500, %v499
  %v604 = vpack.c.b16 %v502, %v501
  %v605 = vpack.c.b16 %v504, %v503
  %v606 = vpack.c.b16 %v506, %v505
  %v607 = vpack.c.b16 %v508, %v507
  %v608 = vpack.c.b16 %v510, %v509
  %v609 = vpack.c.b16 %v512, %v511
  %v610 = vpack.c.b16 %v514, %v513
  %v611 = vpack.c.b16 %v516, %v515
  %v612 = vpack.c.b16 %v518, %v517
  %v613 = vpack.c.b16 %v520, %v519
  %v614 = vpack.c.b16 %v522, %v521
  %v615 = vpack.c.b16 %v524, %v523
  %v616 = vpack.c.b16 %v526, %v525
  %v617 = vpack.c.b16 %v528, %v527
  %v618 = vpack.c.b16 %v530, %v529
  %v619 = vpack.c.b16 %v532, %v531
  %v620 = vpack.c.b16 %v534, %v533
  %v621 = vpack.c.b16 %v536, %v535
  %v622 = vpack.c.b16 %v538, %v537
  %v623 = vpack.c.b16 %v540, %v539
  %v624 = vpack.c.b16 %v542, %v541
  %v625 = vpack.c.b16 %v544, %v543
  %v626 = vpack.c.b16 %v546, %v545
  %v627 = vpack.c.b16 %v548, %v547
  %v628 = vpack.c.b16 %v550, %v549
  %v629 = vpack.c.b16 %v552, %v551
  %v630 = vpack.c.b16 %v554, %v553
  %v631 = vpack.c.b16 %v556, %v555
  %v632 = vpack.c.b16 %v558, %v557
  %v633 = vpack.c.b16 %v560, %v559
  %v634 = vpack.c.b16 %v562, %v561
  %v635 = vpack.c.b16 %v564, %v563
  %v636 = vpack.c.b16 %v566, %v565
  %v637 = vpack.c.b16 %v568, %v567
  %v638 = vpack.c.b16 %v570, %v569
  %v639 = vpack.c.b16 %v572, %v571
  %v640 = vpack.c.b16 %v574, %v573
  %v641 = vpack.c.b16 %v576, %v575
  %v642 = vpack.c.b16 %v578, %v577
  %707 = vmatprep.subr.bf16.mxu0 0
  %708 = vmatpush1.bf16.msra.mxu0 %v579
  %709 = vmatprep.subr.bf16.mxu0 0
  %710 = vmatpush1.bf16.msra.mxu0 %v580
  %711 = vmatprep.subr.bf16.mxu0 0
  %712 = vmatpush1.bf16.msra.mxu0 %v581
  %713 = vmatprep.subr.bf16.mxu0 0
  %714 = vmatpush1.bf16.msra.mxu0 %v582
  %715 = vmatprep.subr.bf16.mxu0 0
  %716 = vmatpush1.bf16.msra.mxu0 %v583
  %717 = vmatprep.subr.bf16.mxu0 0
  %718 = vmatpush1.bf16.msra.mxu0 %v584
  %719 = vmatprep.subr.bf16.mxu0 0
  %720 = vmatpush1.bf16.msra.mxu0 %v585
  %721 = vmatprep.subr.bf16.mxu0 0
  %722 = vmatpush1.bf16.msra.mxu0 %v586
  %723 = vmatprep.subr.bf16.mxu0 0
  %724 = vmatpush1.bf16.msra.mxu0 %v587
  %725 = vmatprep.subr.bf16.mxu0 0
  %726 = vmatpush1.bf16.msra.mxu0 %v588
  %727 = vmatprep.subr.bf16.mxu0 0
  %728 = vmatpush1.bf16.msra.mxu0 %v589
  %729 = vmatprep.subr.bf16.mxu0 0
  %730 = vmatpush1.bf16.msra.mxu0 %v590
  %731 = vmatprep.subr.bf16.mxu0 0
  %732 = vmatpush1.bf16.msra.mxu0 %v591
  %733 = vmatprep.subr.bf16.mxu0 0
  %734 = vmatpush1.bf16.msra.mxu0 %v592
  %735 = vmatprep.subr.bf16.mxu0 0
  %736 = vmatpush1.bf16.msra.mxu0 %v593
  %737 = vmatprep.subr.bf16.mxu0 0
  %738 = vmatpush1.bf16.msra.mxu0 %v594
  %739 = vmatprep.mubr.bf16.mxu0 %v276
  %740 = vmatmul.mubr.bf16.gmra.mrb[0].mxu0 %v275
  %v741 = vpop.f32.mrb[0].mxu0
  %v742 = vadd.f32 %v201, %v741
  %v743 = vpop.f32.mrb[0].mxu0
  %v744 = vpop.f32.mrb[0].mxu0
  %v745 = vadd.f32 %v201, %v744
  %v746 = vpop.f32.mrb[0].mxu0
  %747 = vmatprep.mubr.bf16.mxu0 %v284
  %748 = vmatmul.mubr.bf16.gmra.mrb[0].mxu0 %v283
  %v749 = vpop.f32.mrb[0].mxu0
  %v750 = vadd.f32 %v201, %v749
  %v751 = vpop.f32.mrb[0].mxu0
  %v752 = vpop.f32.mrb[0].mxu0
  %v753 = vadd.f32 %v201, %v752
  %v754 = vpop.f32.mrb[0].mxu0
  %755 = vmatprep.mubr.bf16.mxu0 %v292
  %756 = vmatmul.mubr.bf16.gmra.mrb[0].mxu0 %v291
  %v757 = vpop.f32.mrb[0].mxu0
  %v758 = vadd.f32 %v201, %v757
  %v759 = vpop.f32.mrb[0].mxu0
  %v760 = vpop.f32.mrb[0].mxu0
  %v761 = vadd.f32 %v201, %v760
  %v762 = vpop.f32.mrb[0].mxu0
  %763 = vdwg.mxu0
  %764 = vmatprep.subr.bf16.mxu0 0
  %765 = vmatpush1.bf16.msra.mxu0 %v595
  %766 = vmatprep.subr.bf16.mxu0 0
  %767 = vmatpush1.bf16.msra.mxu0 %v596
  %768 = vmatprep.subr.bf16.mxu0 0
  %769 = vmatpush1.bf16.msra.mxu0 %v597
  %770 = vmatprep.subr.bf16.mxu0 0
  %771 = vmatpush1.bf16.msra.mxu0 %v598
  %772 = vmatprep.subr.bf16.mxu0 0
  %773 = vmatpush1.bf16.msra.mxu0 %v599
  %774 = vmatprep.subr.bf16.mxu0 0
  %775 = vmatpush1.bf16.msra.mxu0 %v600
  %776 = vmatprep.subr.bf16.mxu0 0
  %777 = vmatpush1.bf16.msra.mxu0 %v601
  %778 = vmatprep.subr.bf16.mxu0 0
  %779 = vmatpush1.bf16.msra.mxu0 %v602
  %780 = vmatprep.subr.bf16.mxu0 0
  %781 = vmatpush1.bf16.msra.mxu0 %v603
  %782 = vmatprep.subr.bf16.mxu0 0
  %783 = vmatpush1.bf16.msra.mxu0 %v604
  %784 = vmatprep.subr.bf16.mxu0 0
  %785 = vmatpush1.bf16.msra.mxu0 %v605
  %786 = vmatprep.subr.bf16.mxu0 0
  %787 = vmatpush1.bf16.msra.mxu0 %v606
  %788 = vmatprep.subr.bf16.mxu0 0
  %789 = vmatpush1.bf16.msra.mxu0 %v607
  %790 = vmatprep.subr.bf16.mxu0 0
  %791 = vmatpush1.bf16.msra.mxu0 %v608
  %792 = vmatprep.subr.bf16.mxu0 0
  %793 = vmatpush1.bf16.msra.mxu0 %v609
  %794 = vmatprep.subr.bf16.mxu0 0
  %795 = vmatpush1.bf16.msra.mxu0 %v610
  %796 = vmatprep.mubr.bf16.mxu0 %v278
  %797 = vmatmul.mubr.bf16.gmra.mrb[0].mxu0 %v277
  %v798 = vpop.f32.mrb[0].mxu0
  %v799 = vadd.f32 %v742, %v798
  %v800 = vpop.f32.mrb[0].mxu0
  %v801 = vpop.f32.mrb[0].mxu0
  %v802 = vadd.f32 %v745, %v801
  %v803 = vpop.f32.mrb[0].mxu0
  %804 = vmatprep.mubr.bf16.mxu0 %v286
  %805 = vmatmul.mubr.bf16.gmra.mrb[0].mxu0 %v285
  %v806 = vpop.f32.mrb[0].mxu0
  %v807 = vadd.f32 %v750, %v806
  %v808 = vpop.f32.mrb[0].mxu0
  %v809 = vpop.f32.mrb[0].mxu0
  %v810 = vadd.f32 %v753, %v809
  %v811 = vpop.f32.mrb[0].mxu0
  %812 = vmatprep.mubr.bf16.mxu0 %v294
  %813 = vmatmul.mubr.bf16.gmra.mrb[0].mxu0 %v293
  %v814 = vpop.f32.mrb[0].mxu0
  %v815 = vadd.f32 %v758, %v814
  %v816 = vpop.f32.mrb[0].mxu0
  %v817 = vpop.f32.mrb[0].mxu0
  %v818 = vadd.f32 %v761, %v817
  %v819 = vpop.f32.mrb[0].mxu0
  %820 = vdwg.mxu0
  %821 = vmatprep.subr.bf16.mxu0 0
  %822 = vmatpush1.bf16.msra.mxu0 %v611
  %823 = vmatprep.subr.bf16.mxu0 0
  %824 = vmatpush1.bf16.msra.mxu0 %v612
  %825 = vmatprep.subr.bf16.mxu0 0
  %826 = vmatpush1.bf16.msra.mxu0 %v613
  %827 = vmatprep.subr.bf16.mxu0 0
  %828 = vmatpush1.bf16.msra.mxu0 %v614
  %829 = vmatprep.subr.bf16.mxu0 0
  %830 = vmatpush1.bf16.msra.mxu0 %v615
  %831 = vmatprep.subr.bf16.mxu0 0
  %832 = vmatpush1.bf16.msra.mxu0 %v616
  %833 = vmatprep.subr.bf16.mxu0 0
  %834 = vmatpush1.bf16.msra.mxu0 %v617
  %835 = vmatprep.subr.bf16.mxu0 0
  %836 = vmatpush1.bf16.msra.mxu0 %v618
  %837 = vmatprep.subr.bf16.mxu0 0
  %838 = vmatpush1.bf16.msra.mxu0 %v619
  %839 = vmatprep.subr.bf16.mxu0 0
  %840 = vmatpush1.bf16.msra.mxu0 %v620
  %841 = vmatprep.subr.bf16.mxu0 0
  %842 = vmatpush1.bf16.msra.mxu0 %v621
  %843 = vmatprep.subr.bf16.mxu0 0
  %844 = vmatpush1.bf16.msra.mxu0 %v622
  %845 = vmatprep.subr.bf16.mxu0 0
  %846 = vmatpush1.bf16.msra.mxu0 %v623
  %847 = vmatprep.subr.bf16.mxu0 0
  %848 = vmatpush1.bf16.msra.mxu0 %v624
  %849 = vmatprep.subr.bf16.mxu0 0
  %850 = vmatpush1.bf16.msra.mxu0 %v625
  %851 = vmatprep.subr.bf16.mxu0 0
  %852 = vmatpush1.bf16.msra.mxu0 %v626
  %853 = vmatprep.mubr.bf16.mxu0 %v280
  %854 = vmatmul.mubr.bf16.gmra.mrb[0].mxu0 %v279
  %v855 = vpop.f32.mrb[0].mxu0
  %v856 = vadd.f32 %v799, %v855
  %v857 = vpop.f32.mrb[0].mxu0
  %v858 = vpop.f32.mrb[0].mxu0
  %v859 = vadd.f32 %v802, %v858
  %v860 = vpop.f32.mrb[0].mxu0
  %861 = vmatprep.mubr.bf16.mxu0 %v288
  %862 = vmatmul.mubr.bf16.gmra.mrb[0].mxu0 %v287
  %v863 = vpop.f32.mrb[0].mxu0
  %v864 = vadd.f32 %v807, %v863
  %v865 = vpop.f32.mrb[0].mxu0
  %v866 = vpop.f32.mrb[0].mxu0
  %v867 = vadd.f32 %v810, %v866
  %v868 = vpop.f32.mrb[0].mxu0
  %869 = vmatprep.mubr.bf16.mxu0 %v296
  %870 = vmatmul.mubr.bf16.gmra.mrb[0].mxu0 %v295
  %v871 = vpop.f32.mrb[0].mxu0
  %v872 = vadd.f32 %v815, %v871
  %v873 = vpop.f32.mrb[0].mxu0
  %v874 = vpop.f32.mrb[0].mxu0
  %v875 = vadd.f32 %v818, %v874
  %v876 = vpop.f32.mrb[0].mxu0
  %877 = vdwg.mxu0
  %878 = vmatprep.subr.bf16.mxu0 0
  %879 = vmatpush1.bf16.msra.mxu0 %v627
  %880 = vmatprep.subr.bf16.mxu0 0
  %881 = vmatpush1.bf16.msra.mxu0 %v628
  %882 = vmatprep.subr.bf16.mxu0 0
  %883 = vmatpush1.bf16.msra.mxu0 %v629
  %884 = vmatprep.subr.bf16.mxu0 0
  %885 = vmatpush1.bf16.msra.mxu0 %v630
  %886 = vmatprep.subr.bf16.mxu0 0
  %887 = vmatpush1.bf16.msra.mxu0 %v631
  %888 = vmatprep.subr.bf16.mxu0 0
  %889 = vmatpush1.bf16.msra.mxu0 %v632
  %890 = vmatprep.subr.bf16.mxu0 0
  %891 = vmatpush1.bf16.msra.mxu0 %v633
  %892 = vmatprep.subr.bf16.mxu0 0
  %893 = vmatpush1.bf16.msra.mxu0 %v634
  %894 = vmatprep.subr.bf16.mxu0 0
  %895 = vmatpush1.bf16.msra.mxu0 %v635
  %896 = vmatprep.subr.bf16.mxu0 0
  %897 = vmatpush1.bf16.msra.mxu0 %v636
  %898 = vmatprep.subr.bf16.mxu0 0
  %899 = vmatpush1.bf16.msra.mxu0 %v637
  %900 = vmatprep.subr.bf16.mxu0 0
  %901 = vmatpush1.bf16.msra.mxu0 %v638
  %902 = vmatprep.subr.bf16.mxu0 0
  %903 = vmatpush1.bf16.msra.mxu0 %v639
  %904 = vmatprep.subr.bf16.mxu0 0
  %905 = vmatpush1.bf16.msra.mxu0 %v640
  %906 = vmatprep.subr.bf16.mxu0 0
  %907 = vmatpush1.bf16.msra.mxu0 %v641
  %908 = vmatprep.subr.bf16.mxu0 0
  %909 = vmatpush1.bf16.msra.mxu0 %v642
  %910 = vmatprep.mubr.bf16.mxu0 %v282
  %911 = vmatmul.mubr.bf16.gmra.mrb[0].mxu0 %v281
  %v912 = vpop.f32.mrb[0].mxu0
  %v913 = vadd.f32 %v856, %v912
  %v914 = vpop.f32.mrb[0].mxu0
  %v915 = vpop.f32.mrb[0].mxu0
  %v916 = vadd.f32 %v859, %v915
  %v917 = vpop.f32.mrb[0].mxu0
  %918 = vmatprep.mubr.bf16.mxu0 %v290
  %919 = vmatmul.mubr.bf16.gmra.mrb[0].mxu0 %v289
  %v920 = vpop.f32.mrb[0].mxu0
  %v921 = vadd.f32 %v864, %v920
  %v922 = vpop.f32.mrb[0].mxu0
  %v923 = vpop.f32.mrb[0].mxu0
  %v924 = vadd.f32 %v867, %v923
  %v925 = vpop.f32.mrb[0].mxu0
  %926 = vmatprep.mubr.bf16.mxu0 %v298
  %927 = vmatmul.mubr.bf16.gmra.mrb[0].mxu0 %v297
  %v928 = vpop.f32.mrb[0].mxu0
  %v929 = vadd.f32 %v872, %v928
  %v930 = vpop.f32.mrb[0].mxu0
  %v931 = vpop.f32.mrb[0].mxu0
  %v932 = vadd.f32 %v875, %v931
  %v933 = vpop.f32.mrb[0].mxu0
  %934 = vdwg.mxu0
  %v935 = vmax.f32 %v913, 0.0
  %v936 = vmax.f32 %v916, 0.0
  %v937 = vmax.f32 %v921, 0.0
  %v938 = vmax.f32 %v924, 0.0
  %v939 = vmax.f32 %v929, 0.0
  %v940 = vmax.f32 %v932, 0.0
  %v941 = vpack.c.bf16 %v936, %v935
  %v942 = vpack.c.bf16 %v938, %v937
  %v943 = vpack.c.bf16 %v940, %v939
  %v952 = vunpack.c.l.b16 %v156
  %v953 = vunpack.c.h.b16 %v156
  %v954 = vunpack.c.l.b16 %v157
  %v955 = vunpack.c.h.b16 %v157
  %v956 = vunpack.c.l.b16 %v158
  %v957 = vunpack.c.h.b16 %v158
  %v958 = vunpack.c.l.b16 %v159
  %v959 = vunpack.c.h.b16 %v159
  %v960 = vunpack.c.l.b16 %v160
  %v961 = vunpack.c.h.b16 %v160
  %v962 = vunpack.c.l.b16 %v161
  %v963 = vunpack.c.h.b16 %v161
  %v964 = vunpack.c.l.b16 %v162
  %v965 = vunpack.c.h.b16 %v162
  %v966 = vunpack.c.l.b16 %v163
  %v967 = vunpack.c.h.b16 %v163
  %v968 = vpack.c.b16 %v956, %v952
  %v969 = vpack.c.b16 %v957, %v953
  %v970 = vpack.c.b16 %v958, %v954
  %v971 = vpack.c.b16 %v959, %v955
  %v972 = vpack.c.b16 %v964, %v960
  %v973 = vpack.c.b16 %v965, %v961
  %v974 = vpack.c.b16 %v966, %v962
  %v975 = vpack.c.b16 %v967, %v963
  %vm984 = vcmask 261120
  %v986 = vsel %vm984, %v941, 0
  %v989 = vsel %vm984, %v942, 0
  %v992 = vsel %vm984, %v943, 0
  %994 = vmatprep.subr.bf16.mxu0 %v969
  %995 = vmatpush1.bf16.msra.mxu0 %v968
  %996 = vmatprep.subr.bf16.mxu0 %v973
  %997 = vmatpush1.bf16.msra.mxu0 %v972
  %998 = vmatprep.subr.bf16.mxu0 0
  %999 = vmatpush1.bf16.msra.mxu0 0
  %1000 = vmatprep.subr.bf16.mxu0 0
  %1001 = vmatpush1.bf16.msra.mxu0 0
  %1002 = vmatprep.subr.bf16.mxu0 0
  %1003 = vmatpush1.bf16.msra.mxu0 0
  %1004 = vmatprep.subr.bf16.mxu0 0
  %1005 = vmatpush1.bf16.msra.mxu0 0
  %1006 = vmatprep.subr.bf16.mxu0 0
  %1007 = vmatpush1.bf16.msra.mxu0 0
  %1008 = vmatprep.subr.bf16.mxu0 0
  %1009 = vmatpush1.bf16.msra.mxu0 0
  %1010 = vmatprep.subr.bf16.mxu0 0
  %1011 = vmatpush1.bf16.msra.mxu0 0
  %1012 = vmatprep.subr.bf16.mxu0 0
  %1013 = vmatpush1.bf16.msra.mxu0 0
  %1014 = vmatprep.subr.bf16.mxu0 0
  %1015 = vmatpush1.bf16.msra.mxu0 0
  %1016 = vmatprep.subr.bf16.mxu0 0
  %1017 = vmatpush1.bf16.msra.mxu0 0
  %1018 = vmatprep.subr.bf16.mxu0 0
  %1019 = vmatpush1.bf16.msra.mxu0 0
  %1020 = vmatprep.subr.bf16.mxu0 0
  %1021 = vmatpush1.bf16.msra.mxu0 0
  %1022 = vmatprep.subr.bf16.mxu0 0
  %1023 = vmatpush1.bf16.msra.mxu0 0
  %1024 = vmatprep.subr.bf16.mxu0 0
  %1025 = vmatpush1.bf16.msra.mxu0 0
  %1026 = vmatprep.mubr.bf16.mxu0 0
  %1027 = vmatmul.mubr.bf16.gmra.mrb[0].mxu0 %v986
  %v1028 = vpop.f32.mrb[0].mxu0
  %v1029 = vadd.f32 0.0, %v1028
  %v1030 = vpop.f32.mrb[0].mxu0
  %v1031 = vadd.f32 0.0, %v1030
  %v1032 = vpop.f32.mrb[0].mxu0
  %v1033 = vadd.f32 0.0, %v1032
  %v1034 = vpop.f32.mrb[0].mxu0
  %v1035 = vadd.f32 0.0, %v1034
  %1036 = vmatprep.mubr.bf16.mxu0 0
  %1037 = vmatmul.mubr.bf16.gmra.mrb[0].mxu0 %v989
  %v1038 = vpop.f32.mrb[0].mxu0
  %v1039 = vadd.f32 0.0, %v1038
  %v1040 = vpop.f32.mrb[0].mxu0
  %v1041 = vadd.f32 0.0, %v1040
  %v1042 = vpop.f32.mrb[0].mxu0
  %v1043 = vadd.f32 0.0, %v1042
  %v1044 = vpop.f32.mrb[0].mxu0
  %v1045 = vadd.f32 0.0, %v1044
  %1046 = vmatprep.mubr.bf16.mxu0 0
  %1047 = vmatmul.mubr.bf16.gmra.mrb[0].mxu0 %v992
  %v1048 = vpop.f32.mrb[0].mxu0
  %v1049 = vpop.f32.mrb[0].mxu0
  %v1050 = vpop.f32.mrb[0].mxu0
  %v1051 = vpop.f32.mrb[0].mxu0
  %1052 = vdwg.mxu0
  %1053 = vmatprep.subr.bf16.mxu0 %v971
  %1054 = vmatpush1.bf16.msra.mxu0 %v970
  %1055 = vmatprep.subr.bf16.mxu0 %v975
  %1056 = vmatpush1.bf16.msra.mxu0 %v974
  %1057 = vmatprep.subr.bf16.mxu0 0
  %1058 = vmatpush1.bf16.msra.mxu0 0
  %1059 = vmatprep.subr.bf16.mxu0 0
  %1060 = vmatpush1.bf16.msra.mxu0 0
  %1061 = vmatprep.subr.bf16.mxu0 0
  %1062 = vmatpush1.bf16.msra.mxu0 0
  %1063 = vmatprep.subr.bf16.mxu0 0
  %1064 = vmatpush1.bf16.msra.mxu0 0
  %1065 = vmatprep.subr.bf16.mxu0 0
  %1066 = vmatpush1.bf16.msra.mxu0 0
  %1067 = vmatprep.subr.bf16.mxu0 0
  %1068 = vmatpush1.bf16.msra.mxu0 0
  %1069 = vmatprep.subr.bf16.mxu0 0
  %1070 = vmatpush1.bf16.msra.mxu0 0
  %1071 = vmatprep.subr.bf16.mxu0 0
  %1072 = vmatpush1.bf16.msra.mxu0 0
  %1073 = vmatprep.subr.bf16.mxu0 0
  %1074 = vmatpush1.bf16.msra.mxu0 0
  %1075 = vmatprep.subr.bf16.mxu0 0
  %1076 = vmatpush1.bf16.msra.mxu0 0
  %1077 = vmatprep.subr.bf16.mxu0 0
  %1078 = vmatpush1.bf16.msra.mxu0 0
  %1079 = vmatprep.subr.bf16.mxu0 0
  %1080 = vmatpush1.bf16.msra.mxu0 0
  %1081 = vmatprep.subr.bf16.mxu0 0
  %1082 = vmatpush1.bf16.msra.mxu0 0
  %1083 = vmatprep.subr.bf16.mxu0 0
  %1084 = vmatpush1.bf16.msra.mxu0 0
  %1085 = vmatprep.mubr.bf16.mxu0 0
  %1086 = vmatmul.mubr.bf16.gmra.mrb[0].mxu0 %v986
  %v1087 = vpop.f32.mrb[0].mxu0
  %v1088 = vadd.f32 0.0, %v1087
  %v1089 = vpop.f32.mrb[0].mxu0
  %v1090 = vadd.f32 0.0, %v1089
  %v1091 = vpop.f32.mrb[0].mxu0
  %v1092 = vadd.f32 0.0, %v1091
  %v1093 = vpop.f32.mrb[0].mxu0
  %v1094 = vadd.f32 0.0, %v1093
  %1095 = vmatprep.mubr.bf16.mxu0 0
  %1096 = vmatmul.mubr.bf16.gmra.mrb[0].mxu0 %v989
  %v1097 = vpop.f32.mrb[0].mxu0
  %v1098 = vadd.f32 0.0, %v1097
  %v1099 = vpop.f32.mrb[0].mxu0
  %v1100 = vadd.f32 0.0, %v1099
  %v1101 = vpop.f32.mrb[0].mxu0
  %v1102 = vadd.f32 0.0, %v1101
  %v1103 = vpop.f32.mrb[0].mxu0
  %v1104 = vadd.f32 0.0, %v1103
  %1105 = vmatprep.mubr.bf16.mxu0 0
  %1106 = vmatmul.mubr.bf16.gmra.mrb[0].mxu0 %v992
  %v1107 = vpop.f32.mrb[0].mxu0
  %v1108 = vpop.f32.mrb[0].mxu0
  %v1109 = vpop.f32.mrb[0].mxu0
  %v1110 = vpop.f32.mrb[0].mxu0
  %1111 = vdwg.mxu0
  %v1120 = vunpack.c.l.b16 %v164
  %v1121 = vunpack.c.h.b16 %v164
  %v1122 = vunpack.c.l.b16 %v165
  %v1123 = vunpack.c.h.b16 %v165
  %v1124 = vunpack.c.l.b16 %v166
  %v1125 = vunpack.c.h.b16 %v166
  %v1126 = vunpack.c.l.b16 %v167
  %v1127 = vunpack.c.h.b16 %v167
  %v1128 = vunpack.c.l.b16 %v168
  %v1129 = vunpack.c.h.b16 %v168
  %v1130 = vunpack.c.l.b16 %v169
  %v1131 = vunpack.c.h.b16 %v169
  %v1132 = vunpack.c.l.b16 %v170
  %v1133 = vunpack.c.h.b16 %v170
  %v1134 = vunpack.c.l.b16 %v171
  %v1135 = vunpack.c.h.b16 %v171
  %v1136 = vpack.c.b16 %v1124, %v1120
  %v1137 = vpack.c.b16 %v1125, %v1121
  %v1138 = vpack.c.b16 %v1126, %v1122
  %v1139 = vpack.c.b16 %v1127, %v1123
  %v1140 = vpack.c.b16 %v1132, %v1128
  %v1141 = vpack.c.b16 %v1133, %v1129
  %v1142 = vpack.c.b16 %v1134, %v1130
  %v1143 = vpack.c.b16 %v1135, %v1131
  %1152 = vmatprep.subr.bf16.mxu0 %v1137
  %1153 = vmatpush1.bf16.msra.mxu0 %v1136
  %1154 = vmatprep.subr.bf16.mxu0 %v1141
  %1155 = vmatpush1.bf16.msra.mxu0 %v1140
  %1156 = vmatprep.subr.bf16.mxu0 0
  %1157 = vmatpush1.bf16.msra.mxu0 0
  %1158 = vmatprep.subr.bf16.mxu0 0
  %1159 = vmatpush1.bf16.msra.mxu0 0
  %1160 = vmatprep.subr.bf16.mxu0 0
  %1161 = vmatpush1.bf16.msra.mxu0 0
  %1162 = vmatprep.subr.bf16.mxu0 0
  %1163 = vmatpush1.bf16.msra.mxu0 0
  %1164 = vmatprep.subr.bf16.mxu0 0
  %1165 = vmatpush1.bf16.msra.mxu0 0
  %1166 = vmatprep.subr.bf16.mxu0 0
  %1167 = vmatpush1.bf16.msra.mxu0 0
  %1168 = vmatprep.subr.bf16.mxu0 0
  %1169 = vmatpush1.bf16.msra.mxu0 0
  %1170 = vmatprep.subr.bf16.mxu0 0
  %1171 = vmatpush1.bf16.msra.mxu0 0
  %1172 = vmatprep.subr.bf16.mxu0 0
  %1173 = vmatpush1.bf16.msra.mxu0 0
  %1174 = vmatprep.subr.bf16.mxu0 0
  %1175 = vmatpush1.bf16.msra.mxu0 0
  %1176 = vmatprep.subr.bf16.mxu0 0
  %1177 = vmatpush1.bf16.msra.mxu0 0
  %1178 = vmatprep.subr.bf16.mxu0 0
  %1179 = vmatpush1.bf16.msra.mxu0 0
  %1180 = vmatprep.subr.bf16.mxu0 0
  %1181 = vmatpush1.bf16.msra.mxu0 0
  %1182 = vmatprep.subr.bf16.mxu0 0
  %1183 = vmatpush1.bf16.msra.mxu0 0
  %1184 = vmatprep.mubr.bf16.mxu0 0
  %1185 = vmatmul.mubr.bf16.gmra.mrb[0].mxu0 %v986
  %v1186 = vpop.f32.mrb[0].mxu0
  %v1187 = vpop.f32.mrb[0].mxu0
  %v1188 = vpop.f32.mrb[0].mxu0
  %v1189 = vpop.f32.mrb[0].mxu0
  %1190 = vmatprep.mubr.bf16.mxu0 0
  %1191 = vmatmul.mubr.bf16.gmra.mrb[0].mxu0 %v989
  %v1192 = vpop.f32.mrb[0].mxu0
  %v1193 = vadd.f32 0.0, %v1192
  %v1194 = vpop.f32.mrb[0].mxu0
  %v1195 = vadd.f32 0.0, %v1194
  %v1196 = vpop.f32.mrb[0].mxu0
  %v1197 = vadd.f32 0.0, %v1196
  %v1198 = vpop.f32.mrb[0].mxu0
  %v1199 = vadd.f32 0.0, %v1198
  %1200 = vmatprep.mubr.bf16.mxu0 0
  %1201 = vmatmul.mubr.bf16.gmra.mrb[0].mxu0 %v992
  %v1202 = vpop.f32.mrb[0].mxu0
  %v1203 = vadd.f32 0.0, %v1202
  %v1204 = vpop.f32.mrb[0].mxu0
  %v1205 = vadd.f32 0.0, %v1204
  %v1206 = vpop.f32.mrb[0].mxu0
  %v1207 = vadd.f32 0.0, %v1206
  %v1208 = vpop.f32.mrb[0].mxu0
  %v1209 = vadd.f32 0.0, %v1208
  %1210 = vdwg.mxu0
  %1211 = vmatprep.subr.bf16.mxu0 %v1139
  %1212 = vmatpush1.bf16.msra.mxu0 %v1138
  %1213 = vmatprep.subr.bf16.mxu0 %v1143
  %1214 = vmatpush1.bf16.msra.mxu0 %v1142
  %1215 = vmatprep.subr.bf16.mxu0 0
  %1216 = vmatpush1.bf16.msra.mxu0 0
  %1217 = vmatprep.subr.bf16.mxu0 0
  %1218 = vmatpush1.bf16.msra.mxu0 0
  %1219 = vmatprep.subr.bf16.mxu0 0
  %1220 = vmatpush1.bf16.msra.mxu0 0
  %1221 = vmatprep.subr.bf16.mxu0 0
  %1222 = vmatpush1.bf16.msra.mxu0 0
  %1223 = vmatprep.subr.bf16.mxu0 0
  %1224 = vmatpush1.bf16.msra.mxu0 0
  %1225 = vmatprep.subr.bf16.mxu0 0
  %1226 = vmatpush1.bf16.msra.mxu0 0
  %1227 = vmatprep.subr.bf16.mxu0 0
  %1228 = vmatpush1.bf16.msra.mxu0 0
  %1229 = vmatprep.subr.bf16.mxu0 0
  %1230 = vmatpush1.bf16.msra.mxu0 0
  %1231 = vmatprep.subr.bf16.mxu0 0
  %1232 = vmatpush1.bf16.msra.mxu0 0
  %1233 = vmatprep.subr.bf16.mxu0 0
  %1234 = vmatpush1.bf16.msra.mxu0 0
  %1235 = vmatprep.subr.bf16.mxu0 0
  %1236 = vmatpush1.bf16.msra.mxu0 0
  %1237 = vmatprep.subr.bf16.mxu0 0
  %1238 = vmatpush1.bf16.msra.mxu0 0
  %1239 = vmatprep.subr.bf16.mxu0 0
  %1240 = vmatpush1.bf16.msra.mxu0 0
  %1241 = vmatprep.subr.bf16.mxu0 0
  %1242 = vmatpush1.bf16.msra.mxu0 0
  %1243 = vmatprep.mubr.bf16.mxu0 0
  %1244 = vmatmul.mubr.bf16.gmra.mrb[0].mxu0 %v986
  %v1245 = vpop.f32.mrb[0].mxu0
  %v1246 = vpop.f32.mrb[0].mxu0
  %v1247 = vpop.f32.mrb[0].mxu0
  %v1248 = vpop.f32.mrb[0].mxu0
  %1249 = vmatprep.mubr.bf16.mxu0 0
  %1250 = vmatmul.mubr.bf16.gmra.mrb[0].mxu0 %v989
  %v1251 = vpop.f32.mrb[0].mxu0
  %v1252 = vadd.f32 0.0, %v1251
  %v1253 = vpop.f32.mrb[0].mxu0
  %v1254 = vadd.f32 0.0, %v1253
  %v1255 = vpop.f32.mrb[0].mxu0
  %v1256 = vadd.f32 0.0, %v1255
  %v1257 = vpop.f32.mrb[0].mxu0
  %v1258 = vadd.f32 0.0, %v1257
  %1259 = vmatprep.mubr.bf16.mxu0 0
  %1260 = vmatmul.mubr.bf16.gmra.mrb[0].mxu0 %v992
  %v1261 = vpop.f32.mrb[0].mxu0
  %v1262 = vadd.f32 0.0, %v1261
  %v1263 = vpop.f32.mrb[0].mxu0
  %v1264 = vadd.f32 0.0, %v1263
  %v1265 = vpop.f32.mrb[0].mxu0
  %v1266 = vadd.f32 0.0, %v1265
  %v1267 = vpop.f32.mrb[0].mxu0
  %v1268 = vadd.f32 0.0, %v1267
  %1269 = vdwg.mxu0
  %v1270 = vadd.f32 %v1029, %v1193
  %v1271 = vadd.f32 %v1031, %v1195
  %v1272 = vadd.f32 %v1088, %v1252
  %v1273 = vadd.f32 %v1090, %v1254
  %v1274 = vadd.f32 %v1033, %v1197
  %v1275 = vadd.f32 %v1035, %v1199
  %v1276 = vadd.f32 %v1092, %v1256
  %v1277 = vadd.f32 %v1094, %v1258
  %v1279 = vlaneseq
  %v1280 = vshrl.u32 %v1279, 7
  %v1281 = vsub.s32 0, %v1280
  %v1282 = vrot.slane %v172, %v1281
  %v1283 = vlaneseq
  %v1284 = vshrl.u32 %v1283, 7
  %v1285 = vsub.s32 1, %v1284
  %v1286 = vrot.slane %v172, %v1285
  %v1287 = vlaneseq
  %v1288 = vshrl.u32 %v1287, 7
  %v1289 = vsub.s32 2, %v1288
  %v1290 = vrot.slane %v172, %v1289
  %v1291 = vlaneseq
  %v1292 = vshrl.u32 %v1291, 7
  %v1293 = vsub.s32 3, %v1292
  %v1294 = vrot.slane %v172, %v1293
  %v1299 = vadd.f32 %v1270, %v1282
  %v1300 = vadd.f32 %v1271, %v1286
  %v1301 = vadd.f32 %v1272, %v1290
  %v1302 = vadd.f32 %v1273, %v1294
  %v1303 = vadd.f32 %v1274, %v1282
  %v1304 = vadd.f32 %v1275, %v1286
  %v1305 = vadd.f32 %v1276, %v1290
  %v1306 = vadd.f32 %v1277, %v1294
  %v1307 = vmax.f32 %v1299, 0.0
  %v1308 = vmax.f32 %v1300, 0.0
  %v1309 = vmax.f32 %v1301, 0.0
  %v1310 = vmax.f32 %v1302, 0.0
  %v1311 = vmax.f32 %v1303, 0.0
  %v1312 = vmax.f32 %v1304, 0.0
  %v1313 = vmax.f32 %v1305, 0.0
  %v1314 = vmax.f32 %v1306, 0.0
  %v1315 = vpack.c.bf16 %v1311, %v1307
  %v1316 = vpack.c.bf16 %v1312, %v1308
  %v1317 = vpack.c.bf16 %v1313, %v1309
  %v1318 = vpack.c.bf16 %v1314, %v1310
  %v1319 = vld [vmem:[%s5] sm:$0xf]
  %v1320 = vld [vmem:[%s5 + $0x4] sm:$0xf]
  %v1321 = vld [vmem:[%s5 + $0x8] sm:$0xf]
  %v1322 = vld [vmem:[%s5 + $0xc] sm:$0xf]
  %v1323 = vld [vmem:[%s5 + $0x10] sm:$0xf]
  %v1324 = vld [vmem:[%s5 + $0x14] sm:$0xf]
  %v1325 = vld [vmem:[%s5 + $0x18] sm:$0xf]
  %v1326 = vld [vmem:[%s5 + $0x1c] sm:$0xf]
  %v1327 = vld [vmem:[%s5 + $0x20] sm:$0xf]
  %v1328 = vld [vmem:[%s5 + $0x24] sm:$0xf]
  %v1329 = vld [vmem:[%s5 + $0x28] sm:$0xf]
  %v1330 = vld [vmem:[%s5 + $0x2c] sm:$0xf]
  %v1331 = vld [vmem:[%s5 + $0x30] sm:$0xf]
  %v1332 = vld [vmem:[%s5 + $0x34] sm:$0xf]
  %v1333 = vld [vmem:[%s5 + $0x38] sm:$0xf]
  %v1334 = vld [vmem:[%s5 + $0x3c] sm:$0xf]
  %v1335 = vld [vmem:[%s5 + $0x40] sm:$0xf]
  %v1336 = vld [vmem:[%s5 + $0x44] sm:$0xf]
  %v1337 = vld [vmem:[%s5 + $0x48] sm:$0xf]
  %v1338 = vld [vmem:[%s5 + $0x4c] sm:$0xf]
  %v1339 = vld [vmem:[%s5 + $0x50] sm:$0xf]
  %v1340 = vld [vmem:[%s5 + $0x54] sm:$0xf]
  %v1341 = vld [vmem:[%s5 + $0x58] sm:$0xf]
  %v1342 = vld [vmem:[%s5 + $0x5c] sm:$0xf]
  %v1343 = vld [vmem:[%s5 + $0x60] sm:$0xf]
  %v1344 = vld [vmem:[%s5 + $0x64] sm:$0xf]
  %v1345 = vld [vmem:[%s5 + $0x68] sm:$0xf]
  %v1346 = vld [vmem:[%s5 + $0x6c] sm:$0xf]
  %v1347 = vld [vmem:[%s5 + $0x70] sm:$0xf]
  %v1348 = vld [vmem:[%s5 + $0x74] sm:$0xf]
  %v1349 = vld [vmem:[%s5 + $0x78] sm:$0xf]
  %v1350 = vld [vmem:[%s5 + $0x7c] sm:$0xf]
  %v1351 = vld [vmem:[%s5 + $0x80] sm:$0xf]
  %v1352 = vld [vmem:[%s5 + $0x84] sm:$0xf]
  %v1353 = vld [vmem:[%s5 + $0x88] sm:$0xf]
  %v1354 = vld [vmem:[%s5 + $0x8c] sm:$0xf]
  %v1355 = vld [vmem:[%s5 + $0x90] sm:$0xf]
  %v1356 = vld [vmem:[%s5 + $0x94] sm:$0xf]
  %v1357 = vld [vmem:[%s5 + $0x98] sm:$0xf]
  %v1358 = vld [vmem:[%s5 + $0x9c] sm:$0xf]
  %v1359 = vld [vmem:[%s5 + $0xa0] sm:$0xf]
  %v1360 = vld [vmem:[%s5 + $0xa4] sm:$0xf]
  %v1361 = vld [vmem:[%s5 + $0xa8] sm:$0xf]
  %v1362 = vld [vmem:[%s5 + $0xac] sm:$0xf]
  %v1363 = vld [vmem:[%s5 + $0xb0] sm:$0xf]
  %v1364 = vld [vmem:[%s5 + $0xb4] sm:$0xf]
  %v1365 = vld [vmem:[%s5 + $0xb8] sm:$0xf]
  %v1366 = vld [vmem:[%s5 + $0xbc] sm:$0xf]
  %v1367 = vld [vmem:[%s5 + $0xc0] sm:$0xf]
  %v1368 = vld [vmem:[%s5 + $0xc4] sm:$0xf]
  %v1369 = vld [vmem:[%s5 + $0xc8] sm:$0xf]
  %v1370 = vld [vmem:[%s5 + $0xcc] sm:$0xf]
  %v1371 = vld [vmem:[%s5 + $0xd0] sm:$0xf]
  %v1372 = vld [vmem:[%s5 + $0xd4] sm:$0xf]
  %v1373 = vld [vmem:[%s5 + $0xd8] sm:$0xf]
  %v1374 = vld [vmem:[%s5 + $0xdc] sm:$0xf]
  %v1375 = vld [vmem:[%s5 + $0xe0] sm:$0xf]
  %v1376 = vld [vmem:[%s5 + $0xe4] sm:$0xf]
  %v1377 = vld [vmem:[%s5 + $0xe8] sm:$0xf]
  %v1378 = vld [vmem:[%s5 + $0xec] sm:$0xf]
  %v1379 = vld [vmem:[%s5 + $0xf0] sm:$0xf]
  %v1380 = vld [vmem:[%s5 + $0xf4] sm:$0xf]
  %v1381 = vld [vmem:[%s5 + $0xf8] sm:$0xf]
  %v1382 = vld [vmem:[%s5 + $0xfc] sm:$0xf]
  %v1383 = vadd.f32 %v1029, %v1203
  %v1384 = vadd.f32 %v1031, %v1205
  %v1385 = vadd.f32 %v1088, %v1262
  %v1386 = vadd.f32 %v1090, %v1264
  %v1387 = vadd.f32 %v1033, %v1207
  %v1388 = vadd.f32 %v1035, %v1209
  %v1389 = vadd.f32 %v1092, %v1266
  %v1390 = vadd.f32 %v1094, %v1268
  %v1391 = vadd.f32 %v1383, %v1282
  %v1392 = vadd.f32 %v1384, %v1286
  %v1393 = vadd.f32 %v1385, %v1290
  %v1394 = vadd.f32 %v1386, %v1294
  %v1395 = vadd.f32 %v1387, %v1282
  %v1396 = vadd.f32 %v1388, %v1286
  %v1397 = vadd.f32 %v1389, %v1290
  %v1398 = vadd.f32 %v1390, %v1294
  %v1399 = vmax.f32 %v1391, 0.0
  %v1400 = vmax.f32 %v1392, 0.0
  %v1401 = vmax.f32 %v1393, 0.0
  %v1402 = vmax.f32 %v1394, 0.0
  %v1403 = vmax.f32 %v1395, 0.0
  %v1404 = vmax.f32 %v1396, 0.0
  %v1405 = vmax.f32 %v1397, 0.0
  %v1406 = vmax.f32 %v1398, 0.0
  %v1407 = vpack.c.bf16 %v1403, %v1399
  %v1408 = vpack.c.bf16 %v1404, %v1400
  %v1409 = vpack.c.bf16 %v1405, %v1401
  %v1410 = vpack.c.bf16 %v1406, %v1402
  %v1411 = vld [vmem:[%s5 + $0x100] sm:$0xf]
  %v1412 = vld [vmem:[%s5 + $0x104] sm:$0xf]
  %v1413 = vld [vmem:[%s5 + $0x108] sm:$0xf]
  %v1414 = vld [vmem:[%s5 + $0x10c] sm:$0xf]
  %v1415 = vld [vmem:[%s5 + $0x110] sm:$0xf]
  %v1416 = vld [vmem:[%s5 + $0x114] sm:$0xf]
  %v1417 = vld [vmem:[%s5 + $0x118] sm:$0xf]
  %v1418 = vld [vmem:[%s5 + $0x11c] sm:$0xf]
  %v1419 = vld [vmem:[%s5 + $0x120] sm:$0xf]
  %v1420 = vld [vmem:[%s5 + $0x124] sm:$0xf]
  %v1421 = vld [vmem:[%s5 + $0x128] sm:$0xf]
  %v1422 = vld [vmem:[%s5 + $0x12c] sm:$0xf]
  %v1423 = vld [vmem:[%s5 + $0x130] sm:$0xf]
  %v1424 = vld [vmem:[%s5 + $0x134] sm:$0xf]
  %v1425 = vld [vmem:[%s5 + $0x138] sm:$0xf]
  %v1426 = vld [vmem:[%s5 + $0x13c] sm:$0xf]
  %v1427 = vld [vmem:[%s5 + $0x140] sm:$0xf]
  %v1428 = vld [vmem:[%s5 + $0x144] sm:$0xf]
  %v1429 = vld [vmem:[%s5 + $0x148] sm:$0xf]
  %v1430 = vld [vmem:[%s5 + $0x14c] sm:$0xf]
  %v1431 = vld [vmem:[%s5 + $0x150] sm:$0xf]
  %v1432 = vld [vmem:[%s5 + $0x154] sm:$0xf]
  %v1433 = vld [vmem:[%s5 + $0x158] sm:$0xf]
  %v1434 = vld [vmem:[%s5 + $0x15c] sm:$0xf]
  %v1435 = vld [vmem:[%s5 + $0x160] sm:$0xf]
  %v1436 = vld [vmem:[%s5 + $0x164] sm:$0xf]
  %v1437 = vld [vmem:[%s5 + $0x168] sm:$0xf]
  %v1438 = vld [vmem:[%s5 + $0x16c] sm:$0xf]
  %v1439 = vld [vmem:[%s5 + $0x170] sm:$0xf]
  %v1440 = vld [vmem:[%s5 + $0x174] sm:$0xf]
  %v1441 = vld [vmem:[%s5 + $0x178] sm:$0xf]
  %v1442 = vld [vmem:[%s5 + $0x17c] sm:$0xf]
  %v1443 = vld [vmem:[%s5 + $0x180] sm:$0xf]
  %v1444 = vld [vmem:[%s5 + $0x184] sm:$0xf]
  %v1445 = vld [vmem:[%s5 + $0x188] sm:$0xf]
  %v1446 = vld [vmem:[%s5 + $0x18c] sm:$0xf]
  %v1447 = vld [vmem:[%s5 + $0x190] sm:$0xf]
  %v1448 = vld [vmem:[%s5 + $0x194] sm:$0xf]
  %v1449 = vld [vmem:[%s5 + $0x198] sm:$0xf]
  %v1450 = vld [vmem:[%s5 + $0x19c] sm:$0xf]
  %v1451 = vld [vmem:[%s5 + $0x1a0] sm:$0xf]
  %v1452 = vld [vmem:[%s5 + $0x1a4] sm:$0xf]
  %v1453 = vld [vmem:[%s5 + $0x1a8] sm:$0xf]
  %v1454 = vld [vmem:[%s5 + $0x1ac] sm:$0xf]
  %v1455 = vld [vmem:[%s5 + $0x1b0] sm:$0xf]
  %v1456 = vld [vmem:[%s5 + $0x1b4] sm:$0xf]
  %v1457 = vld [vmem:[%s5 + $0x1b8] sm:$0xf]
  %v1458 = vld [vmem:[%s5 + $0x1bc] sm:$0xf]
  %v1459 = vld [vmem:[%s5 + $0x1c0] sm:$0xf]
  %v1460 = vld [vmem:[%s5 + $0x1c4] sm:$0xf]
  %v1461 = vld [vmem:[%s5 + $0x1c8] sm:$0xf]
  %v1462 = vld [vmem:[%s5 + $0x1cc] sm:$0xf]
  %v1463 = vld [vmem:[%s5 + $0x1d0] sm:$0xf]
  %v1464 = vld [vmem:[%s5 + $0x1d4] sm:$0xf]
  %v1465 = vld [vmem:[%s5 + $0x1d8] sm:$0xf]
  %v1466 = vld [vmem:[%s5 + $0x1dc] sm:$0xf]
  %v1467 = vld [vmem:[%s5 + $0x1e0] sm:$0xf]
  %v1468 = vld [vmem:[%s5 + $0x1e4] sm:$0xf]
  %v1469 = vld [vmem:[%s5 + $0x1e8] sm:$0xf]
  %v1470 = vld [vmem:[%s5 + $0x1ec] sm:$0xf]
  %v1471 = vld [vmem:[%s5 + $0x1f0] sm:$0xf]
  %v1472 = vld [vmem:[%s5 + $0x1f4] sm:$0xf]
  %v1473 = vld [vmem:[%s5 + $0x1f8] sm:$0xf]
  %v1474 = vld [vmem:[%s5 + $0x1fc] sm:$0xf]
  %v1539 = vunpack.c.l.b16 %v1411
  %v1540 = vunpack.c.l.b16 %v1412
  %v1541 = vunpack.c.l.b16 %v1413
  %v1542 = vunpack.c.l.b16 %v1414
  %v1543 = vunpack.c.l.b16 %v1415
  %v1544 = vunpack.c.l.b16 %v1416
  %v1545 = vunpack.c.l.b16 %v1417
  %v1546 = vunpack.c.l.b16 %v1418
  %v1547 = vunpack.c.l.b16 %v1419
  %v1548 = vunpack.c.l.b16 %v1420
  %v1549 = vunpack.c.l.b16 %v1421
  %v1550 = vunpack.c.l.b16 %v1422
  %v1551 = vunpack.c.l.b16 %v1423
  %v1552 = vunpack.c.l.b16 %v1424
  %v1553 = vunpack.c.l.b16 %v1425
  %v1554 = vunpack.c.l.b16 %v1426
  %v1555 = vunpack.c.l.b16 %v1427
  %v1556 = vunpack.c.l.b16 %v1428
  %v1557 = vunpack.c.l.b16 %v1429
  %v1558 = vunpack.c.l.b16 %v1430
  %v1559 = vunpack.c.l.b16 %v1431
  %v1560 = vunpack.c.l.b16 %v1432
  %v1561 = vunpack.c.l.b16 %v1433
  %v1562 = vunpack.c.l.b16 %v1434
  %v1563 = vunpack.c.l.b16 %v1435
  %v1564 = vunpack.c.l.b16 %v1436
  %v1565 = vunpack.c.l.b16 %v1437
  %v1566 = vunpack.c.l.b16 %v1438
  %v1567 = vunpack.c.l.b16 %v1439
  %v1568 = vunpack.c.l.b16 %v1440
  %v1569 = vunpack.c.l.b16 %v1441
  %v1570 = vunpack.c.l.b16 %v1442
  %v1571 = vunpack.c.l.b16 %v1443
  %v1572 = vunpack.c.l.b16 %v1444
  %v1573 = vunpack.c.l.b16 %v1445
  %v1574 = vunpack.c.l.b16 %v1446
  %v1575 = vunpack.c.l.b16 %v1447
  %v1576 = vunpack.c.l.b16 %v1448
  %v1577 = vunpack.c.l.b16 %v1449
  %v1578 = vunpack.c.l.b16 %v1450
  %v1579 = vunpack.c.l.b16 %v1451
  %v1580 = vunpack.c.l.b16 %v1452
  %v1581 = vunpack.c.l.b16 %v1453
  %v1582 = vunpack.c.l.b16 %v1454
  %v1583 = vunpack.c.l.b16 %v1455
  %v1584 = vunpack.c.l.b16 %v1456
  %v1585 = vunpack.c.l.b16 %v1457
  %v1586 = vunpack.c.l.b16 %v1458
  %v1587 = vunpack.c.l.b16 %v1459
  %v1588 = vunpack.c.l.b16 %v1460
  %v1589 = vunpack.c.l.b16 %v1461
  %v1590 = vunpack.c.l.b16 %v1462
  %v1591 = vunpack.c.l.b16 %v1463
  %v1592 = vunpack.c.l.b16 %v1464
  %v1593 = vunpack.c.l.b16 %v1465
  %v1594 = vunpack.c.l.b16 %v1466
  %v1595 = vunpack.c.l.b16 %v1467
  %v1596 = vunpack.c.l.b16 %v1468
  %v1597 = vunpack.c.l.b16 %v1469
  %v1598 = vunpack.c.l.b16 %v1470
  %v1599 = vunpack.c.l.b16 %v1471
  %v1600 = vunpack.c.l.b16 %v1472
  %v1601 = vunpack.c.l.b16 %v1473
  %v1602 = vunpack.c.l.b16 %v1474
  %v1603 = vpack.c.b16 %v1540, %v1539
  %v1604 = vpack.c.b16 %v1542, %v1541
  %v1605 = vpack.c.b16 %v1544, %v1543
  %v1606 = vpack.c.b16 %v1546, %v1545
  %v1607 = vpack.c.b16 %v1548, %v1547
  %v1608 = vpack.c.b16 %v1550, %v1549
  %v1609 = vpack.c.b16 %v1552, %v1551
  %v1610 = vpack.c.b16 %v1554, %v1553
  %v1611 = vpack.c.b16 %v1556, %v1555
  %v1612 = vpack.c.b16 %v1558, %v1557
  %v1613 = vpack.c.b16 %v1560, %v1559
  %v1614 = vpack.c.b16 %v1562, %v1561
  %v1615 = vpack.c.b16 %v1564, %v1563
  %v1616 = vpack.c.b16 %v1566, %v1565
  %v1617 = vpack.c.b16 %v1568, %v1567
  %v1618 = vpack.c.b16 %v1570, %v1569
  %v1619 = vpack.c.b16 %v1572, %v1571
  %v1620 = vpack.c.b16 %v1574, %v1573
  %v1621 = vpack.c.b16 %v1576, %v1575
  %v1622 = vpack.c.b16 %v1578, %v1577
  %v1623 = vpack.c.b16 %v1580, %v1579
  %v1624 = vpack.c.b16 %v1582, %v1581
  %v1625 = vpack.c.b16 %v1584, %v1583
  %v1626 = vpack.c.b16 %v1586, %v1585
  %v1627 = vpack.c.b16 %v1588, %v1587
  %v1628 = vpack.c.b16 %v1590, %v1589
  %v1629 = vpack.c.b16 %v1592, %v1591
  %v1630 = vpack.c.b16 %v1594, %v1593
  %v1631 = vpack.c.b16 %v1596, %v1595
  %v1632 = vpack.c.b16 %v1598, %v1597
  %v1633 = vpack.c.b16 %v1600, %v1599
  %v1634 = vpack.c.b16 %v1602, %v1601
  %1667 = vmatprep.subr.bf16.mxu0 0
  %1668 = vmatpush1.bf16.msra.mxu0 %v1603
  %1669 = vmatprep.subr.bf16.mxu0 0
  %1670 = vmatpush1.bf16.msra.mxu0 %v1604
  %1671 = vmatprep.subr.bf16.mxu0 0
  %1672 = vmatpush1.bf16.msra.mxu0 %v1605
  %1673 = vmatprep.subr.bf16.mxu0 0
  %1674 = vmatpush1.bf16.msra.mxu0 %v1606
  %1675 = vmatprep.subr.bf16.mxu0 0
  %1676 = vmatpush1.bf16.msra.mxu0 %v1607
  %1677 = vmatprep.subr.bf16.mxu0 0
  %1678 = vmatpush1.bf16.msra.mxu0 %v1608
  %1679 = vmatprep.subr.bf16.mxu0 0
  %1680 = vmatpush1.bf16.msra.mxu0 %v1609
  %1681 = vmatprep.subr.bf16.mxu0 0
  %1682 = vmatpush1.bf16.msra.mxu0 %v1610
  %1683 = vmatprep.subr.bf16.mxu0 0
  %1684 = vmatpush1.bf16.msra.mxu0 %v1611
  %1685 = vmatprep.subr.bf16.mxu0 0
  %1686 = vmatpush1.bf16.msra.mxu0 %v1612
  %1687 = vmatprep.subr.bf16.mxu0 0
  %1688 = vmatpush1.bf16.msra.mxu0 %v1613
  %1689 = vmatprep.subr.bf16.mxu0 0
  %1690 = vmatpush1.bf16.msra.mxu0 %v1614
  %1691 = vmatprep.subr.bf16.mxu0 0
  %1692 = vmatpush1.bf16.msra.mxu0 %v1615
  %1693 = vmatprep.subr.bf16.mxu0 0
  %1694 = vmatpush1.bf16.msra.mxu0 %v1616
  %1695 = vmatprep.subr.bf16.mxu0 0
  %1696 = vmatpush1.bf16.msra.mxu0 %v1617
  %1697 = vmatprep.subr.bf16.mxu0 0
  %1698 = vmatpush1.bf16.msra.mxu0 %v1618
  %1699 = vmatprep.mubr.bf16.mxu0 %v1408
  %1700 = vmatmul.mubr.bf16.gmra.mrb[0].mxu0 %v1407
  %v1701 = vpop.f32.mrb[0].mxu0
  %v1702 = vadd.f32 0.0, %v1701
  %v1703 = vpop.f32.mrb[0].mxu0
  %v1704 = vpop.f32.mrb[0].mxu0
  %v1705 = vadd.f32 0.0, %v1704
  %v1706 = vpop.f32.mrb[0].mxu0
  %1707 = vdwg.mxu0
  %1708 = vmatprep.subr.bf16.mxu0 0
  %1709 = vmatpush1.bf16.msra.mxu0 %v1619
  %1710 = vmatprep.subr.bf16.mxu0 0
  %1711 = vmatpush1.bf16.msra.mxu0 %v1620
  %1712 = vmatprep.subr.bf16.mxu0 0
  %1713 = vmatpush1.bf16.msra.mxu0 %v1621
  %1714 = vmatprep.subr.bf16.mxu0 0
  %1715 = vmatpush1.bf16.msra.mxu0 %v1622
  %1716 = vmatprep.subr.bf16.mxu0 0
  %1717 = vmatpush1.bf16.msra.mxu0 %v1623
  %1718 = vmatprep.subr.bf16.mxu0 0
  %1719 = vmatpush1.bf16.msra.mxu0 %v1624
  %1720 = vmatprep.subr.bf16.mxu0 0
  %1721 = vmatpush1.bf16.msra.mxu0 %v1625
  %1722 = vmatprep.subr.bf16.mxu0 0
  %1723 = vmatpush1.bf16.msra.mxu0 %v1626
  %1724 = vmatprep.subr.bf16.mxu0 0
  %1725 = vmatpush1.bf16.msra.mxu0 %v1627
  %1726 = vmatprep.subr.bf16.mxu0 0
  %1727 = vmatpush1.bf16.msra.mxu0 %v1628
  %1728 = vmatprep.subr.bf16.mxu0 0
  %1729 = vmatpush1.bf16.msra.mxu0 %v1629
  %1730 = vmatprep.subr.bf16.mxu0 0
  %1731 = vmatpush1.bf16.msra.mxu0 %v1630
  %1732 = vmatprep.subr.bf16.mxu0 0
  %1733 = vmatpush1.bf16.msra.mxu0 %v1631
  %1734 = vmatprep.subr.bf16.mxu0 0
  %1735 = vmatpush1.bf16.msra.mxu0 %v1632
  %1736 = vmatprep.subr.bf16.mxu0 0
  %1737 = vmatpush1.bf16.msra.mxu0 %v1633
  %1738 = vmatprep.subr.bf16.mxu0 0
  %1739 = vmatpush1.bf16.msra.mxu0 %v1634
  %1740 = vmatprep.mubr.bf16.mxu0 %v1410
  %1741 = vmatmul.mubr.bf16.gmra.mrb[0].mxu0 %v1409
  %v1742 = vpop.f32.mrb[0].mxu0
  %v1743 = vadd.f32 %v1702, %v1742
  %v1744 = vpop.f32.mrb[0].mxu0
  %v1745 = vpop.f32.mrb[0].mxu0
  %v1746 = vadd.f32 %v1705, %v1745
  %v1747 = vpop.f32.mrb[0].mxu0
  %1748 = vdwg.mxu0
  %v1813 = vunpack.c.l.b16 %v1319
  %v1814 = vunpack.c.l.b16 %v1320
  %v1815 = vunpack.c.l.b16 %v1321
  %v1816 = vunpack.c.l.b16 %v1322
  %v1817 = vunpack.c.l.b16 %v1323
  %v1818 = vunpack.c.l.b16 %v1324
  %v1819 = vunpack.c.l.b16 %v1325
  %v1820 = vunpack.c.l.b16 %v1326
  %v1821 = vunpack.c.l.b16 %v1327
  %v1822 = vunpack.c.l.b16 %v1328
  %v1823 = vunpack.c.l.b16 %v1329
  %v1824 = vunpack.c.l.b16 %v1330
  %v1825 = vunpack.c.l.b16 %v1331
  %v1826 = vunpack.c.l.b16 %v1332
  %v1827 = vunpack.c.l.b16 %v1333
  %v1828 = vunpack.c.l.b16 %v1334
  %v1829 = vunpack.c.l.b16 %v1335
  %v1830 = vunpack.c.l.b16 %v1336
  %v1831 = vunpack.c.l.b16 %v1337
  %v1832 = vunpack.c.l.b16 %v1338
  %v1833 = vunpack.c.l.b16 %v1339
  %v1834 = vunpack.c.l.b16 %v1340
  %v1835 = vunpack.c.l.b16 %v1341
  %v1836 = vunpack.c.l.b16 %v1342
  %v1837 = vunpack.c.l.b16 %v1343
  %v1838 = vunpack.c.l.b16 %v1344
  %v1839 = vunpack.c.l.b16 %v1345
  %v1840 = vunpack.c.l.b16 %v1346
  %v1841 = vunpack.c.l.b16 %v1347
  %v1842 = vunpack.c.l.b16 %v1348
  %v1843 = vunpack.c.l.b16 %v1349
  %v1844 = vunpack.c.l.b16 %v1350
  %v1845 = vunpack.c.l.b16 %v1351
  %v1846 = vunpack.c.l.b16 %v1352
  %v1847 = vunpack.c.l.b16 %v1353
  %v1848 = vunpack.c.l.b16 %v1354
  %v1849 = vunpack.c.l.b16 %v1355
  %v1850 = vunpack.c.l.b16 %v1356
  %v1851 = vunpack.c.l.b16 %v1357
  %v1852 = vunpack.c.l.b16 %v1358
  %v1853 = vunpack.c.l.b16 %v1359
  %v1854 = vunpack.c.l.b16 %v1360
  %v1855 = vunpack.c.l.b16 %v1361
  %v1856 = vunpack.c.l.b16 %v1362
  %v1857 = vunpack.c.l.b16 %v1363
  %v1858 = vunpack.c.l.b16 %v1364
  %v1859 = vunpack.c.l.b16 %v1365
  %v1860 = vunpack.c.l.b16 %v1366
  %v1861 = vunpack.c.l.b16 %v1367
  %v1862 = vunpack.c.l.b16 %v1368
  %v1863 = vunpack.c.l.b16 %v1369
  %v1864 = vunpack.c.l.b16 %v1370
  %v1865 = vunpack.c.l.b16 %v1371
  %v1866 = vunpack.c.l.b16 %v1372
  %v1867 = vunpack.c.l.b16 %v1373
  %v1868 = vunpack.c.l.b16 %v1374
  %v1869 = vunpack.c.l.b16 %v1375
  %v1870 = vunpack.c.l.b16 %v1376
  %v1871 = vunpack.c.l.b16 %v1377
  %v1872 = vunpack.c.l.b16 %v1378
  %v1873 = vunpack.c.l.b16 %v1379
  %v1874 = vunpack.c.l.b16 %v1380
  %v1875 = vunpack.c.l.b16 %v1381
  %v1876 = vunpack.c.l.b16 %v1382
  %v1877 = vpack.c.b16 %v1814, %v1813
  %v1878 = vpack.c.b16 %v1816, %v1815
  %v1879 = vpack.c.b16 %v1818, %v1817
  %v1880 = vpack.c.b16 %v1820, %v1819
  %v1881 = vpack.c.b16 %v1822, %v1821
  %v1882 = vpack.c.b16 %v1824, %v1823
  %v1883 = vpack.c.b16 %v1826, %v1825
  %v1884 = vpack.c.b16 %v1828, %v1827
  %v1885 = vpack.c.b16 %v1830, %v1829
  %v1886 = vpack.c.b16 %v1832, %v1831
  %v1887 = vpack.c.b16 %v1834, %v1833
  %v1888 = vpack.c.b16 %v1836, %v1835
  %v1889 = vpack.c.b16 %v1838, %v1837
  %v1890 = vpack.c.b16 %v1840, %v1839
  %v1891 = vpack.c.b16 %v1842, %v1841
  %v1892 = vpack.c.b16 %v1844, %v1843
  %v1893 = vpack.c.b16 %v1846, %v1845
  %v1894 = vpack.c.b16 %v1848, %v1847
  %v1895 = vpack.c.b16 %v1850, %v1849
  %v1896 = vpack.c.b16 %v1852, %v1851
  %v1897 = vpack.c.b16 %v1854, %v1853
  %v1898 = vpack.c.b16 %v1856, %v1855
  %v1899 = vpack.c.b16 %v1858, %v1857
  %v1900 = vpack.c.b16 %v1860, %v1859
  %v1901 = vpack.c.b16 %v1862, %v1861
  %v1902 = vpack.c.b16 %v1864, %v1863
  %v1903 = vpack.c.b16 %v1866, %v1865
  %v1904 = vpack.c.b16 %v1868, %v1867
  %v1905 = vpack.c.b16 %v1870, %v1869
  %v1906 = vpack.c.b16 %v1872, %v1871
  %v1907 = vpack.c.b16 %v1874, %v1873
  %v1908 = vpack.c.b16 %v1876, %v1875
  %1941 = vmatprep.subr.bf16.mxu0 0
  %1942 = vmatpush1.bf16.msra.mxu0 %v1877
  %1943 = vmatprep.subr.bf16.mxu0 0
  %1944 = vmatpush1.bf16.msra.mxu0 %v1878
  %1945 = vmatprep.subr.bf16.mxu0 0
  %1946 = vmatpush1.bf16.msra.mxu0 %v1879
  %1947 = vmatprep.subr.bf16.mxu0 0
  %1948 = vmatpush1.bf16.msra.mxu0 %v1880
  %1949 = vmatprep.subr.bf16.mxu0 0
  %1950 = vmatpush1.bf16.msra.mxu0 %v1881
  %1951 = vmatprep.subr.bf16.mxu0 0
  %1952 = vmatpush1.bf16.msra.mxu0 %v1882
  %1953 = vmatprep.subr.bf16.mxu0 0
  %1954 = vmatpush1.bf16.msra.mxu0 %v1883
  %1955 = vmatprep.subr.bf16.mxu0 0
  %1956 = vmatpush1.bf16.msra.mxu0 %v1884
  %1957 = vmatprep.subr.bf16.mxu0 0
  %1958 = vmatpush1.bf16.msra.mxu0 %v1885
  %1959 = vmatprep.subr.bf16.mxu0 0
  %1960 = vmatpush1.bf16.msra.mxu0 %v1886
  %1961 = vmatprep.subr.bf16.mxu0 0
  %1962 = vmatpush1.bf16.msra.mxu0 %v1887
  %1963 = vmatprep.subr.bf16.mxu0 0
  %1964 = vmatpush1.bf16.msra.mxu0 %v1888
  %1965 = vmatprep.subr.bf16.mxu0 0
  %1966 = vmatpush1.bf16.msra.mxu0 %v1889
  %1967 = vmatprep.subr.bf16.mxu0 0
  %1968 = vmatpush1.bf16.msra.mxu0 %v1890
  %1969 = vmatprep.subr.bf16.mxu0 0
  %1970 = vmatpush1.bf16.msra.mxu0 %v1891
  %1971 = vmatprep.subr.bf16.mxu0 0
  %1972 = vmatpush1.bf16.msra.mxu0 %v1892
  %1973 = vmatprep.mubr.bf16.mxu0 %v1316
  %1974 = vmatmul.mubr.bf16.gmra.mrb[0].mxu0 %v1315
  %v1975 = vpop.f32.mrb[0].mxu0
  %v1976 = vadd.f32 %v1743, %v1975
  %v1977 = vpop.f32.mrb[0].mxu0
  %v1978 = vpop.f32.mrb[0].mxu0
  %v1979 = vadd.f32 %v1746, %v1978
  %v1980 = vpop.f32.mrb[0].mxu0
  %1981 = vdwg.mxu0
  %1982 = vmatprep.subr.bf16.mxu0 0
  %1983 = vmatpush1.bf16.msra.mxu0 %v1893
  %1984 = vmatprep.subr.bf16.mxu0 0
  %1985 = vmatpush1.bf16.msra.mxu0 %v1894
  %1986 = vmatprep.subr.bf16.mxu0 0
  %1987 = vmatpush1.bf16.msra.mxu0 %v1895
  %1988 = vmatprep.subr.bf16.mxu0 0
  %1989 = vmatpush1.bf16.msra.mxu0 %v1896
  %1990 = vmatprep.subr.bf16.mxu0 0
  %1991 = vmatpush1.bf16.msra.mxu0 %v1897
  %1992 = vmatprep.subr.bf16.mxu0 0
  %1993 = vmatpush1.bf16.msra.mxu0 %v1898
  %1994 = vmatprep.subr.bf16.mxu0 0
  %1995 = vmatpush1.bf16.msra.mxu0 %v1899
  %1996 = vmatprep.subr.bf16.mxu0 0
  %1997 = vmatpush1.bf16.msra.mxu0 %v1900
  %1998 = vmatprep.subr.bf16.mxu0 0
  %1999 = vmatpush1.bf16.msra.mxu0 %v1901
  %2000 = vmatprep.subr.bf16.mxu0 0
  %2001 = vmatpush1.bf16.msra.mxu0 %v1902
  %2002 = vmatprep.subr.bf16.mxu0 0
  %2003 = vmatpush1.bf16.msra.mxu0 %v1903
  %2004 = vmatprep.subr.bf16.mxu0 0
  %2005 = vmatpush1.bf16.msra.mxu0 %v1904
  %2006 = vmatprep.subr.bf16.mxu0 0
  %2007 = vmatpush1.bf16.msra.mxu0 %v1905
  %2008 = vmatprep.subr.bf16.mxu0 0
  %2009 = vmatpush1.bf16.msra.mxu0 %v1906
  %2010 = vmatprep.subr.bf16.mxu0 0
  %2011 = vmatpush1.bf16.msra.mxu0 %v1907
  %2012 = vmatprep.subr.bf16.mxu0 0
  %2013 = vmatpush1.bf16.msra.mxu0 %v1908
  %2014 = vmatprep.mubr.bf16.mxu0 %v1318
  %2015 = vmatmul.mubr.bf16.gmra.mrb[0].mxu0 %v1317
  %v2016 = vpop.f32.mrb[0].mxu0
  %v2017 = vadd.f32 %v1976, %v2016
  %v2018 = vpop.f32.mrb[0].mxu0
  %v2019 = vpop.f32.mrb[0].mxu0
  %v2020 = vadd.f32 %v1979, %v2019
  %v2021 = vpop.f32.mrb[0].mxu0
  %2022 = vdwg.mxu0
  %v2023 = vadd.f32 %v1039, %v1203
  %v2024 = vadd.f32 %v1041, %v1205
  %v2025 = vadd.f32 %v1098, %v1262
  %v2026 = vadd.f32 %v1100, %v1264
  %v2027 = vadd.f32 %v1043, %v1207
  %v2028 = vadd.f32 %v1045, %v1209
  %v2029 = vadd.f32 %v1102, %v1266
  %v2030 = vadd.f32 %v1104, %v1268
  %v2031 = vadd.f32 %v2023, %v1282
  %v2032 = vadd.f32 %v2024, %v1286
  %v2033 = vadd.f32 %v2025, %v1290
  %v2034 = vadd.f32 %v2026, %v1294
  %v2035 = vadd.f32 %v2027, %v1282
  %v2036 = vadd.f32 %v2028, %v1286
  %v2037 = vadd.f32 %v2029, %v1290
  %v2038 = vadd.f32 %v2030, %v1294
  %v2039 = vmax.f32 %v2031, 0.0
  %v2040 = vmax.f32 %v2032, 0.0
  %v2041 = vmax.f32 %v2033, 0.0
  %v2042 = vmax.f32 %v2034, 0.0
  %v2043 = vmax.f32 %v2035, 0.0
  %v2044 = vmax.f32 %v2036, 0.0
  %v2045 = vmax.f32 %v2037, 0.0
  %v2046 = vmax.f32 %v2038, 0.0
  %v2047 = vpack.c.bf16 %v2043, %v2039
  %v2048 = vpack.c.bf16 %v2044, %v2040
  %v2049 = vpack.c.bf16 %v2045, %v2041
  %v2050 = vpack.c.bf16 %v2046, %v2042
  %v2051 = vld [vmem:[%s5 + $0x200] sm:$0xf]
  %v2052 = vld [vmem:[%s5 + $0x204] sm:$0xf]
  %v2053 = vld [vmem:[%s5 + $0x208] sm:$0xf]
  %v2054 = vld [vmem:[%s5 + $0x20c] sm:$0xf]
  %v2055 = vld [vmem:[%s5 + $0x210] sm:$0xf]
  %v2056 = vld [vmem:[%s5 + $0x214] sm:$0xf]
  %v2057 = vld [vmem:[%s5 + $0x218] sm:$0xf]
  %v2058 = vld [vmem:[%s5 + $0x21c] sm:$0xf]
  %v2059 = vld [vmem:[%s5 + $0x220] sm:$0xf]
  %v2060 = vld [vmem:[%s5 + $0x224] sm:$0xf]
  %v2061 = vld [vmem:[%s5 + $0x228] sm:$0xf]
  %v2062 = vld [vmem:[%s5 + $0x22c] sm:$0xf]
  %v2063 = vld [vmem:[%s5 + $0x230] sm:$0xf]
  %v2064 = vld [vmem:[%s5 + $0x234] sm:$0xf]
  %v2065 = vld [vmem:[%s5 + $0x238] sm:$0xf]
  %v2066 = vld [vmem:[%s5 + $0x23c] sm:$0xf]
  %v2067 = vld [vmem:[%s5 + $0x240] sm:$0xf]
  %v2068 = vld [vmem:[%s5 + $0x244] sm:$0xf]
  %v2069 = vld [vmem:[%s5 + $0x248] sm:$0xf]
  %v2070 = vld [vmem:[%s5 + $0x24c] sm:$0xf]
  %v2071 = vld [vmem:[%s5 + $0x250] sm:$0xf]
  %v2072 = vld [vmem:[%s5 + $0x254] sm:$0xf]
  %v2073 = vld [vmem:[%s5 + $0x258] sm:$0xf]
  %v2074 = vld [vmem:[%s5 + $0x25c] sm:$0xf]
  %v2075 = vld [vmem:[%s5 + $0x260] sm:$0xf]
  %v2076 = vld [vmem:[%s5 + $0x264] sm:$0xf]
  %v2077 = vld [vmem:[%s5 + $0x268] sm:$0xf]
  %v2078 = vld [vmem:[%s5 + $0x26c] sm:$0xf]
  %v2079 = vld [vmem:[%s5 + $0x270] sm:$0xf]
  %v2080 = vld [vmem:[%s5 + $0x274] sm:$0xf]
  %v2081 = vld [vmem:[%s5 + $0x278] sm:$0xf]
  %v2082 = vld [vmem:[%s5 + $0x27c] sm:$0xf]
  %v2083 = vld [vmem:[%s5 + $0x280] sm:$0xf]
  %v2084 = vld [vmem:[%s5 + $0x284] sm:$0xf]
  %v2085 = vld [vmem:[%s5 + $0x288] sm:$0xf]
  %v2086 = vld [vmem:[%s5 + $0x28c] sm:$0xf]
  %v2087 = vld [vmem:[%s5 + $0x290] sm:$0xf]
  %v2088 = vld [vmem:[%s5 + $0x294] sm:$0xf]
  %v2089 = vld [vmem:[%s5 + $0x298] sm:$0xf]
  %v2090 = vld [vmem:[%s5 + $0x29c] sm:$0xf]
  %v2091 = vld [vmem:[%s5 + $0x2a0] sm:$0xf]
  %v2092 = vld [vmem:[%s5 + $0x2a4] sm:$0xf]
  %v2093 = vld [vmem:[%s5 + $0x2a8] sm:$0xf]
  %v2094 = vld [vmem:[%s5 + $0x2ac] sm:$0xf]
  %v2095 = vld [vmem:[%s5 + $0x2b0] sm:$0xf]
  %v2096 = vld [vmem:[%s5 + $0x2b4] sm:$0xf]
  %v2097 = vld [vmem:[%s5 + $0x2b8] sm:$0xf]
  %v2098 = vld [vmem:[%s5 + $0x2bc] sm:$0xf]
  %v2099 = vld [vmem:[%s5 + $0x2c0] sm:$0xf]
  %v2100 = vld [vmem:[%s5 + $0x2c4] sm:$0xf]
  %v2101 = vld [vmem:[%s5 + $0x2c8] sm:$0xf]
  %v2102 = vld [vmem:[%s5 + $0x2cc] sm:$0xf]
  %v2103 = vld [vmem:[%s5 + $0x2d0] sm:$0xf]
  %v2104 = vld [vmem:[%s5 + $0x2d4] sm:$0xf]
  %v2105 = vld [vmem:[%s5 + $0x2d8] sm:$0xf]
  %v2106 = vld [vmem:[%s5 + $0x2dc] sm:$0xf]
  %v2107 = vld [vmem:[%s5 + $0x2e0] sm:$0xf]
  %v2108 = vld [vmem:[%s5 + $0x2e4] sm:$0xf]
  %v2109 = vld [vmem:[%s5 + $0x2e8] sm:$0xf]
  %v2110 = vld [vmem:[%s5 + $0x2ec] sm:$0xf]
  %v2111 = vld [vmem:[%s5 + $0x2f0] sm:$0xf]
  %v2112 = vld [vmem:[%s5 + $0x2f4] sm:$0xf]
  %v2113 = vld [vmem:[%s5 + $0x2f8] sm:$0xf]
  %v2114 = vld [vmem:[%s5 + $0x2fc] sm:$0xf]
  %v2179 = vunpack.c.l.b16 %v2051
  %v2180 = vunpack.c.l.b16 %v2052
  %v2181 = vunpack.c.l.b16 %v2053
  %v2182 = vunpack.c.l.b16 %v2054
  %v2183 = vunpack.c.l.b16 %v2055
  %v2184 = vunpack.c.l.b16 %v2056
  %v2185 = vunpack.c.l.b16 %v2057
  %v2186 = vunpack.c.l.b16 %v2058
  %v2187 = vunpack.c.l.b16 %v2059
  %v2188 = vunpack.c.l.b16 %v2060
  %v2189 = vunpack.c.l.b16 %v2061
  %v2190 = vunpack.c.l.b16 %v2062
  %v2191 = vunpack.c.l.b16 %v2063
  %v2192 = vunpack.c.l.b16 %v2064
  %v2193 = vunpack.c.l.b16 %v2065
  %v2194 = vunpack.c.l.b16 %v2066
  %v2195 = vunpack.c.l.b16 %v2067
  %v2196 = vunpack.c.l.b16 %v2068
  %v2197 = vunpack.c.l.b16 %v2069
  %v2198 = vunpack.c.l.b16 %v2070
  %v2199 = vunpack.c.l.b16 %v2071
  %v2200 = vunpack.c.l.b16 %v2072
  %v2201 = vunpack.c.l.b16 %v2073
  %v2202 = vunpack.c.l.b16 %v2074
  %v2203 = vunpack.c.l.b16 %v2075
  %v2204 = vunpack.c.l.b16 %v2076
  %v2205 = vunpack.c.l.b16 %v2077
  %v2206 = vunpack.c.l.b16 %v2078
  %v2207 = vunpack.c.l.b16 %v2079
  %v2208 = vunpack.c.l.b16 %v2080
  %v2209 = vunpack.c.l.b16 %v2081
  %v2210 = vunpack.c.l.b16 %v2082
  %v2211 = vunpack.c.l.b16 %v2083
  %v2212 = vunpack.c.l.b16 %v2084
  %v2213 = vunpack.c.l.b16 %v2085
  %v2214 = vunpack.c.l.b16 %v2086
  %v2215 = vunpack.c.l.b16 %v2087
  %v2216 = vunpack.c.l.b16 %v2088
  %v2217 = vunpack.c.l.b16 %v2089
  %v2218 = vunpack.c.l.b16 %v2090
  %v2219 = vunpack.c.l.b16 %v2091
  %v2220 = vunpack.c.l.b16 %v2092
  %v2221 = vunpack.c.l.b16 %v2093
  %v2222 = vunpack.c.l.b16 %v2094
  %v2223 = vunpack.c.l.b16 %v2095
  %v2224 = vunpack.c.l.b16 %v2096
  %v2225 = vunpack.c.l.b16 %v2097
  %v2226 = vunpack.c.l.b16 %v2098
  %v2227 = vunpack.c.l.b16 %v2099
  %v2228 = vunpack.c.l.b16 %v2100
  %v2229 = vunpack.c.l.b16 %v2101
  %v2230 = vunpack.c.l.b16 %v2102
  %v2231 = vunpack.c.l.b16 %v2103
  %v2232 = vunpack.c.l.b16 %v2104
  %v2233 = vunpack.c.l.b16 %v2105
  %v2234 = vunpack.c.l.b16 %v2106
  %v2235 = vunpack.c.l.b16 %v2107
  %v2236 = vunpack.c.l.b16 %v2108
  %v2237 = vunpack.c.l.b16 %v2109
  %v2238 = vunpack.c.l.b16 %v2110
  %v2239 = vunpack.c.l.b16 %v2111
  %v2240 = vunpack.c.l.b16 %v2112
  %v2241 = vunpack.c.l.b16 %v2113
  %v2242 = vunpack.c.l.b16 %v2114
  %v2243 = vpack.c.b16 %v2180, %v2179
  %v2244 = vpack.c.b16 %v2182, %v2181
  %v2245 = vpack.c.b16 %v2184, %v2183
  %v2246 = vpack.c.b16 %v2186, %v2185
  %v2247 = vpack.c.b16 %v2188, %v2187
  %v2248 = vpack.c.b16 %v2190, %v2189
  %v2249 = vpack.c.b16 %v2192, %v2191
  %v2250 = vpack.c.b16 %v2194, %v2193
  %v2251 = vpack.c.b16 %v2196, %v2195
  %v2252 = vpack.c.b16 %v2198, %v2197
  %v2253 = vpack.c.b16 %v2200, %v2199
  %v2254 = vpack.c.b16 %v2202, %v2201
  %v2255 = vpack.c.b16 %v2204, %v2203
  %v2256 = vpack.c.b16 %v2206, %v2205
  %v2257 = vpack.c.b16 %v2208, %v2207
  %v2258 = vpack.c.b16 %v2210, %v2209
  %v2259 = vpack.c.b16 %v2212, %v2211
  %v2260 = vpack.c.b16 %v2214, %v2213
  %v2261 = vpack.c.b16 %v2216, %v2215
  %v2262 = vpack.c.b16 %v2218, %v2217
  %v2263 = vpack.c.b16 %v2220, %v2219
  %v2264 = vpack.c.b16 %v2222, %v2221
  %v2265 = vpack.c.b16 %v2224, %v2223
  %v2266 = vpack.c.b16 %v2226, %v2225
  %v2267 = vpack.c.b16 %v2228, %v2227
  %v2268 = vpack.c.b16 %v2230, %v2229
  %v2269 = vpack.c.b16 %v2232, %v2231
  %v2270 = vpack.c.b16 %v2234, %v2233
  %v2271 = vpack.c.b16 %v2236, %v2235
  %v2272 = vpack.c.b16 %v2238, %v2237
  %v2273 = vpack.c.b16 %v2240, %v2239
  %v2274 = vpack.c.b16 %v2242, %v2241
  %2307 = vmatprep.subr.bf16.mxu0 0
  %2308 = vmatpush1.bf16.msra.mxu0 %v2243
  %2309 = vmatprep.subr.bf16.mxu0 0
  %2310 = vmatpush1.bf16.msra.mxu0 %v2244
  %2311 = vmatprep.subr.bf16.mxu0 0
  %2312 = vmatpush1.bf16.msra.mxu0 %v2245
  %2313 = vmatprep.subr.bf16.mxu0 0
  %2314 = vmatpush1.bf16.msra.mxu0 %v2246
  %2315 = vmatprep.subr.bf16.mxu0 0
  %2316 = vmatpush1.bf16.msra.mxu0 %v2247
  %2317 = vmatprep.subr.bf16.mxu0 0
  %2318 = vmatpush1.bf16.msra.mxu0 %v2248
  %2319 = vmatprep.subr.bf16.mxu0 0
  %2320 = vmatpush1.bf16.msra.mxu0 %v2249
  %2321 = vmatprep.subr.bf16.mxu0 0
  %2322 = vmatpush1.bf16.msra.mxu0 %v2250
  %2323 = vmatprep.subr.bf16.mxu0 0
  %2324 = vmatpush1.bf16.msra.mxu0 %v2251
  %2325 = vmatprep.subr.bf16.mxu0 0
  %2326 = vmatpush1.bf16.msra.mxu0 %v2252
  %2327 = vmatprep.subr.bf16.mxu0 0
  %2328 = vmatpush1.bf16.msra.mxu0 %v2253
  %2329 = vmatprep.subr.bf16.mxu0 0
  %2330 = vmatpush1.bf16.msra.mxu0 %v2254
  %2331 = vmatprep.subr.bf16.mxu0 0
  %2332 = vmatpush1.bf16.msra.mxu0 %v2255
  %2333 = vmatprep.subr.bf16.mxu0 0
  %2334 = vmatpush1.bf16.msra.mxu0 %v2256
  %2335 = vmatprep.subr.bf16.mxu0 0
  %2336 = vmatpush1.bf16.msra.mxu0 %v2257
  %2337 = vmatprep.subr.bf16.mxu0 0
  %2338 = vmatpush1.bf16.msra.mxu0 %v2258
  %2339 = vmatprep.mubr.bf16.mxu0 %v2048
  %2340 = vmatmul.mubr.bf16.gmra.mrb[0].mxu0 %v2047
  %v2341 = vpop.f32.mrb[0].mxu0
  %v2342 = vadd.f32 0.0, %v2341
  %v2343 = vpop.f32.mrb[0].mxu0
  %v2344 = vpop.f32.mrb[0].mxu0
  %v2345 = vadd.f32 0.0, %v2344
  %v2346 = vpop.f32.mrb[0].mxu0
  %2347 = vdwg.mxu0
  %2348 = vmatprep.subr.bf16.mxu0 0
  %2349 = vmatpush1.bf16.msra.mxu0 %v2259
  %2350 = vmatprep.subr.bf16.mxu0 0
  %2351 = vmatpush1.bf16.msra.mxu0 %v2260
  %2352 = vmatprep.subr.bf16.mxu0 0
  %2353 = vmatpush1.bf16.msra.mxu0 %v2261
  %2354 = vmatprep.subr.bf16.mxu0 0
  %2355 = vmatpush1.bf16.msra.mxu0 %v2262
  %2356 = vmatprep.subr.bf16.mxu0 0
  %2357 = vmatpush1.bf16.msra.mxu0 %v2263
  %2358 = vmatprep.subr.bf16.mxu0 0
  %2359 = vmatpush1.bf16.msra.mxu0 %v2264
  %2360 = vmatprep.subr.bf16.mxu0 0
  %2361 = vmatpush1.bf16.msra.mxu0 %v2265
  %2362 = vmatprep.subr.bf16.mxu0 0
  %2363 = vmatpush1.bf16.msra.mxu0 %v2266
  %2364 = vmatprep.subr.bf16.mxu0 0
  %2365 = vmatpush1.bf16.msra.mxu0 %v2267
  %2366 = vmatprep.subr.bf16.mxu0 0
  %2367 = vmatpush1.bf16.msra.mxu0 %v2268
  %2368 = vmatprep.subr.bf16.mxu0 0
  %2369 = vmatpush1.bf16.msra.mxu0 %v2269
  %2370 = vmatprep.subr.bf16.mxu0 0
  %2371 = vmatpush1.bf16.msra.mxu0 %v2270
  %2372 = vmatprep.subr.bf16.mxu0 0
  %2373 = vmatpush1.bf16.msra.mxu0 %v2271
  %2374 = vmatprep.subr.bf16.mxu0 0
  %2375 = vmatpush1.bf16.msra.mxu0 %v2272
  %2376 = vmatprep.subr.bf16.mxu0 0
  %2377 = vmatpush1.bf16.msra.mxu0 %v2273
  %2378 = vmatprep.subr.bf16.mxu0 0
  %2379 = vmatpush1.bf16.msra.mxu0 %v2274
  %2380 = vmatprep.mubr.bf16.mxu0 %v2050
  %2381 = vmatmul.mubr.bf16.gmra.mrb[0].mxu0 %v2049
  %v2382 = vpop.f32.mrb[0].mxu0
  %v2383 = vadd.f32 %v2342, %v2382
  %v2384 = vpop.f32.mrb[0].mxu0
  %v2385 = vpop.f32.mrb[0].mxu0
  %v2386 = vadd.f32 %v2345, %v2385
  %v2387 = vpop.f32.mrb[0].mxu0
  %2388 = vdwg.mxu0
  %v2389 = vadd.f32 %v2017, %v2383
  %v2390 = vadd.f32 %v2020, %v2386
  %v2391 = vld [vmem:[%s6] sm:$0x1]
  %v2393 = vlaneseq
  %v2394 = vshrl.u32 %v2393, 7
  %v2395 = vsub.s32 0, %v2394
  %v2396 = vrot.slane %v2391, %v2395
  %v2398 = vadd.f32 %v2389, %v2396
  %v2399 = vadd.f32 %v2390, %v2396
  %2400 = vst [vmem:[%s7] sm:$0xff] %v2398
  %2401 = vst [vmem:[%s7 + $0x8] sm:$0xff] %v2399
  // Predicated region
  $region30: #{vcopn_forward.1} parent=0 // pred_check
    _
  $region31: #{vcopn_forward.1} parent=0 // pred_check_branch
    %2403 = sbr.rel (0) target = $region33
  $region32: #{vcopn_forward.1} parent=0 // pred_region
    _
  $region33: #{vcopn_forward.1} parent=0 // pred_fallthru
    _
  // Predicated region
  $region34: #{vcopn_forward.1} parent=0 // pred_check
    _
  $region35: #{vcopn_forward.1} parent=0 // pred_check_branch
    %2405 = sbr.rel (0) target = $region37
  $region36: #{vcopn_forward.1} parent=0 // pred_region
    _
  $region37: #{vcopn_forward.1} parent=0 // pred_fallthru
    _

</llo_original>
